<compile_context>
chip_gen: v7x
topology: tpu7x:2x2x1
jax: 0.10.0
libtpu: 0.0.40
codegen_flags: <defaults>
</compile_context>

<pallas_src>
import math

import jax
import jax.numpy as jnp
from jax import lax
from jax.experimental import pallas as pl
from jax.experimental.pallas import tpu as pltpu

# ---- config (small, consistent with the module) ----
B = 2            # batch
T = 8            # num tokens (== context_length)
D = 32           # emb_dim
N_HEADS = 4
HEAD_DIM = D // N_HEADS
HIDDEN = 4 * D   # FFN hidden
EPS = 1e-8
BT = B * T
NEG_INF = -1e30            # finite mask value (diagonal is always unmasked, so safe)
_GELU_C = math.sqrt(2.0 / math.pi)


def _layernorm(v, scale, shift):
    mean = jnp.mean(v, axis=-1, keepdims=True)
    c = v - mean
    var = jnp.mean(c * c, axis=-1, keepdims=True)           # unbiased=False
    return scale * (c * lax.rsqrt(var + EPS)) + shift       # rsqrt goes to the EUP


def _gelu_tanh(x):
    return 0.5 * x * (1.0 + jnp.tanh(_GELU_C * (x + 0.044715 * x * x * x)))


def transformer_block_kernel(
    x_ref,                        # (B*T, D)
    ln1_s_ref, ln1_b_ref,         # (1, D)
    w_qkv_ref, b_qkv_ref,         # (D, 3D), (1, 3D)   packed torch layout
    w_out_ref, b_out_ref,         # (D, D), (1, D)
    ln2_s_ref, ln2_b_ref,         # (1, D)
    w_fc1_ref, b_fc1_ref,         # (D, HIDDEN), (1, HIDDEN)
    w_fc2_ref, b_fc2_ref,         # (HIDDEN, D), (1, D)
    o_ref,                        # (B*T, D)
):
    x = x_ref[...]                                               # (BT, D)

    # ---- ln1 ----
    h1 = _layernorm(x, ln1_s_ref[...], ln1_b_ref[...])

    # ---- multi-head attention ----
    # Fused QKV projection: single wide MXU push.
    qkv = jnp.dot(h1, w_qkv_ref[...],
                  preferred_element_type=jnp.float32) + b_qkv_ref[...]      # (BT, 3D)

    # torch column layout: c = h*3*hd + which*hd + d  (which: 0=Q, 1=K, 2=V).
    # Split heads with static lane slices (XLU has slack here), group axis g = h*B + b.
    q_list, k_list, v_list = [], [], []
    for h in range(N_HEADS):
        base = h * 3 * HEAD_DIM
        q_list.append(qkv[:, base:base + HEAD_DIM].reshape(B, T, HEAD_DIM))
        k_list.append(qkv[:, base + HEAD_DIM:base + 2 * HEAD_DIM].reshape(B, T, HEAD_DIM))
        v_list.append(qkv[:, base + 2 * HEAD_DIM:base + 3 * HEAD_DIM].reshape(B, T, HEAD_DIM))
    qg = jnp.concatenate(q_list, axis=0)                         # (H*B, T, hd)
    kg = jnp.concatenate(k_list, axis=0)
    vg = jnp.concatenate(v_list, axis=0)

    scale = HEAD_DIM ** (-0.5)
    s = jnp.einsum("gqd,gkd->gqk", qg, kg,
                   preferred_element_type=jnp.float32) * scale   # (G, T, T)

    # Causal mask (shape-static; single invocation, folds at compile time).
    row = lax.broadcasted_iota(jnp.int32, (T, T), 0)
    col = lax.broadcasted_iota(jnp.int32, (T, T), 1)
    causal = (col <= row)[None]                                  # (1, T, T)
    s = jnp.where(causal, s, NEG_INF)
    s = s - jnp.max(s, axis=-1, keepdims=True)
    p = jnp.exp(s)
    p = p * pl.reciprocal(jnp.sum(p, axis=-1, keepdims=True), approx=True)   # EUP divide

    og = jnp.einsum("gqk,gkd->gqd", p, vg,
                    preferred_element_type=jnp.float32)          # (H*B, T, hd)

    # Regroup heads to (BT, D) with torch column order (h*hd + d), then ONE out-proj matmul.
    attn_cat = jnp.concatenate(
        [og[h * B:(h + 1) * B].reshape(BT, HEAD_DIM) for h in range(N_HEADS)],
        axis=-1)                                                 # (BT, D)
    attn = jnp.dot(attn_cat, w_out_ref[...],
                   preferred_element_type=jnp.float32) + b_out_ref[...]

    # residual 1 (dropout is identity at drop_rate=0)
    x1 = attn + x

    # ---- ln2 + FFN ----
    h2 = _layernorm(x1, ln2_s_ref[...], ln2_b_ref[...])
    f = jnp.dot(h2, w_fc1_ref[...], preferred_element_type=jnp.float32) + b_fc1_ref[...]
    f = _gelu_tanh(f)
    f = jnp.dot(f, w_fc2_ref[...], preferred_element_type=jnp.float32) + b_fc2_ref[...]

    # residual 2
    o_ref[...] = (f + x1).astype(o_ref.dtype)


def transformer_block(x, params):
    x2 = x.reshape(BT, D)                 # collapse batch wrapper-side: single kernel invocation
    n_in = 1 + len(params)
    out = pl.pallas_call(
        transformer_block_kernel,
        out_shape=jax.ShapeDtypeStruct((BT, D), x.dtype),
        # Everything explicitly VMEM-resident; no grid (whole tiny problem fits).
        in_specs=[pl.BlockSpec(memory_space=pltpu.MemorySpace.VMEM) for _ in range(n_in)],
        out_specs=pl.BlockSpec(memory_space=pltpu.MemorySpace.VMEM),
    )(x2, *params)
    return out.reshape(B, T, D)


# ---- pure-JAX reference (mirrors the PyTorch forward exactly) ----
def reference(x, params):
    (ln1_s, ln1_b, w_qkv, b_qkv, w_out, b_out,
     ln2_s, ln2_b, w_fc1, b_fc1, w_fc2, b_fc2) = params

    def ln(v, s, b):
        mean = jnp.mean(v, axis=-1, keepdims=True)
        var = jnp.mean((v - mean) ** 2, axis=-1, keepdims=True)
        return s[0] * ((v - mean) / jnp.sqrt(var + EPS)) + b[0]

    shortcut = x
    h = ln(x, ln1_s, ln1_b)
    qkv = h @ w_qkv + b_qkv[0]                                               # (B, T, 3D)
    qkv = qkv.reshape(B, T, N_HEADS, 3 * HEAD_DIM).transpose(0, 2, 1, 3)     # (B, H, T, 3hd)
    q, k, v = jnp.split(qkv, 3, axis=-1)
    s = jnp.einsum("bhqd,bhkd->bhqk", q, k) * HEAD_DIM ** (-0.5)
    mask = jnp.tril(jnp.ones((T, T), dtype=bool))
    s = jnp.where(mask[None, None], s, -jnp.inf)
    p = jax.nn.softmax(s, axis=-1)
    o = jnp.einsum("bhqk,bhkd->bhqd", p, v).transpose(0, 2, 1, 3).reshape(B, T, D)
    o = o @ w_out + b_out[0]
    x1 = o + shortcut
    h2 = ln(x1, ln2_s, ln2_b)
    f = h2 @ w_fc1 + b_fc1[0]
    f = 0.5 * f * (1.0 + jnp.tanh(_GELU_C * (f + 0.044715 * f ** 3)))
    f = f @ w_fc2 + b_fc2[0]
    return f + x1


def init_params(key):
    ks = jax.random.split(key, 8)
    std = 0.02
    ln1_s = jnp.ones((1, D), jnp.float32)
    ln1_b = jnp.zeros((1, D), jnp.float32)
    ln2_s = jnp.ones((1, D), jnp.float32)
    ln2_b = jnp.zeros((1, D), jnp.float32)
    w_qkv = jax.random.normal(ks[0], (D, 3 * D), jnp.float32) * std
    b_qkv = jax.random.normal(ks[1], (1, 3 * D), jnp.float32) * std   # qkv_bias=True
    w_out = jax.random.normal(ks[2], (D, D), jnp.float32) * std
    b_out = jax.random.normal(ks[3], (1, D), jnp.float32) * std
    w_fc1 = jax.random.normal(ks[4], (D, HIDDEN), jnp.float32) * std
    b_fc1 = jax.random.normal(ks[5], (1, HIDDEN), jnp.float32) * std
    w_fc2 = jax.random.normal(ks[6], (HIDDEN, D), jnp.float32) * std
    b_fc2 = jax.random.normal(ks[7], (1, D), jnp.float32) * std
    return (ln1_s, ln1_b, w_qkv, b_qkv, w_out, b_out,
            ln2_s, ln2_b, w_fc1, b_fc1, w_fc2, b_fc2)


if __name__ == "__main__":
    key = jax.random.PRNGKey(0)
    kx, kp = jax.random.split(key)
    x = jax.random.normal(kx, (B, T, D), jnp.float32)
    params = init_params(kp)

    out = transformer_block(x, params)
    out = jax.block_until_ready(out)

    ref = reference(x, params)
    assert out.shape == (B, T, D)
    # tolerance allows for the approximate EUP reciprocal in the softmax denominator
    assert jnp.allclose(out, ref, rtol=5e-4, atol=5e-4), (
        f"max abs diff {jnp.max(jnp.abs(out - ref))}")
    print("KERNEL_OK")
</pallas_src>

<mosaic_0001>
module attributes {stable_mosaic.version = 11 : i64} {
  func.func @transformer_block_kernel(%arg0: memref<16x32xf32, #tpu.memory_space<vmem>>, %arg1: memref<1x32xf32, #tpu.memory_space<vmem>>, %arg2: memref<1x32xf32, #tpu.memory_space<vmem>>, %arg3: memref<32x96xf32, #tpu.memory_space<vmem>>, %arg4: memref<1x96xf32, #tpu.memory_space<vmem>>, %arg5: memref<32x32xf32, #tpu.memory_space<vmem>>, %arg6: memref<1x32xf32, #tpu.memory_space<vmem>>, %arg7: memref<1x32xf32, #tpu.memory_space<vmem>>, %arg8: memref<1x32xf32, #tpu.memory_space<vmem>>, %arg9: memref<32x128xf32, #tpu.memory_space<vmem>>, %arg10: memref<1x128xf32, #tpu.memory_space<vmem>>, %arg11: memref<128x32xf32, #tpu.memory_space<vmem>>, %arg12: memref<1x32xf32, #tpu.memory_space<vmem>>, %arg13: memref<16x32xf32, #tpu.memory_space<vmem>>) attributes {dimension_semantics = [], scalar_prefetch = 0 : i64, scratch_operands = 0 : i64, tpu.core_type = #tpu.core_type<tc>} {
    %c0 = arith.constant 0 : index
    %c0_0 = arith.constant 0 : index
    %0 = vector.load %arg0[%c0, %c0_0] : memref<16x32xf32, #tpu.memory_space<vmem>>, vector<16x32xf32>
    %c0_1 = arith.constant 0 : index
    %c0_2 = arith.constant 0 : index
    %1 = vector.load %arg1[%c0_1, %c0_2] : memref<1x32xf32, #tpu.memory_space<vmem>>, vector<1x32xf32>
    %c0_3 = arith.constant 0 : index
    %c0_4 = arith.constant 0 : index
    %2 = vector.load %arg2[%c0_3, %c0_4] : memref<1x32xf32, #tpu.memory_space<vmem>>, vector<1x32xf32>
    %cst = arith.constant dense<0.000000e+00> : vector<16xf32>
    %3 = vector.multi_reduction <add>, %0, %cst [1] : vector<16x32xf32> to vector<16xf32>
    %4 = vector.shape_cast %3 : vector<16xf32> to vector<16x1xf32>
    %cst_5 = arith.constant 3.200000e+01 : f32
    %5 = vector.broadcast %cst_5 : f32 to vector<16x1xf32>
    %6 = arith.divf %4, %5 : vector<16x1xf32>
    %7 = vector.broadcast %6 : vector<16x1xf32> to vector<16x32xf32>
    %8 = arith.subf %0, %7 : vector<16x32xf32>
    %9 = arith.mulf %8, %8 : vector<16x32xf32>
    %cst_6 = arith.constant dense<0.000000e+00> : vector<16xf32>
    %10 = vector.multi_reduction <add>, %9, %cst_6 [1] : vector<16x32xf32> to vector<16xf32>
    %11 = vector.shape_cast %10 : vector<16xf32> to vector<16x1xf32>
    %cst_7 = arith.constant 3.200000e+01 : f32
    %12 = vector.broadcast %cst_7 : f32 to vector<16x1xf32>
    %13 = arith.divf %11, %12 : vector<16x1xf32>
    %cst_8 = arith.constant 9.99999993E-9 : f32
    %14 = vector.broadcast %cst_8 : f32 to vector<16x1xf32>
    %15 = arith.addf %13, %14 : vector<16x1xf32>
    %16 = math.rsqrt %15 : vector<16x1xf32>
    %17 = vector.broadcast %16 : vector<16x1xf32> to vector<16x32xf32>
    %18 = arith.mulf %8, %17 : vector<16x32xf32>
    %19 = vector.broadcast %1 : vector<1x32xf32> to vector<16x32xf32>
    %20 = arith.mulf %19, %18 : vector<16x32xf32>
    %21 = vector.broadcast %2 : vector<1x32xf32> to vector<16x32xf32>
    %22 = arith.addf %20, %21 : vector<16x32xf32>
    %c0_9 = arith.constant 0 : index
    %c0_10 = arith.constant 0 : index
    %23 = vector.load %arg3[%c0_9, %c0_10] : memref<32x96xf32, #tpu.memory_space<vmem>>, vector<32x96xf32>
    %cst_11 = arith.constant dense<0.000000e+00> : vector<16x96xf32>
    %24 = tpu.matmul %22, %23, %cst_11 {dimension_numbers = #tpu.dot_dimension_numbers<[1], [0], [0], [1], [0, 0, 1, 1], [], []>} : vector<16x32xf32>, vector<32x96xf32>, vector<16x96xf32> -> vector<16x96xf32>
    %c0_12 = arith.constant 0 : index
    %c0_13 = arith.constant 0 : index
    %25 = vector.load %arg4[%c0_12, %c0_13] : memref<1x96xf32, #tpu.memory_space<vmem>>, vector<1x96xf32>
    %26 = vector.broadcast %25 : vector<1x96xf32> to vector<16x96xf32>
    %27 = arith.addf %24, %26 : vector<16x96xf32>
    %28 = vector.extract_strided_slice %27 {offsets = [0, 0], sizes = [16, 8], strides = [1, 1]} : vector<16x96xf32> to vector<16x8xf32>
    %29 = vector.shape_cast %28 : vector<16x8xf32> to vector<2x8x8xf32>
    %30 = vector.extract_strided_slice %27 {offsets = [0, 8], sizes = [16, 8], strides = [1, 1]} : vector<16x96xf32> to vector<16x8xf32>
    %31 = vector.shape_cast %30 : vector<16x8xf32> to vector<2x8x8xf32>
    %32 = vector.extract_strided_slice %27 {offsets = [0, 16], sizes = [16, 8], strides = [1, 1]} : vector<16x96xf32> to vector<16x8xf32>
    %33 = vector.shape_cast %32 : vector<16x8xf32> to vector<2x8x8xf32>
    %34 = vector.extract_strided_slice %27 {offsets = [0, 24], sizes = [16, 8], strides = [1, 1]} : vector<16x96xf32> to vector<16x8xf32>
    %35 = vector.shape_cast %34 : vector<16x8xf32> to vector<2x8x8xf32>
    %36 = vector.extract_strided_slice %27 {offsets = [0, 32], sizes = [16, 8], strides = [1, 1]} : vector<16x96xf32> to vector<16x8xf32>
    %37 = vector.shape_cast %36 : vector<16x8xf32> to vector<2x8x8xf32>
    %38 = vector.extract_strided_slice %27 {offsets = [0, 40], sizes = [16, 8], strides = [1, 1]} : vector<16x96xf32> to vector<16x8xf32>
    %39 = vector.shape_cast %38 : vector<16x8xf32> to vector<2x8x8xf32>
    %40 = vector.extract_strided_slice %27 {offsets = [0, 48], sizes = [16, 8], strides = [1, 1]} : vector<16x96xf32> to vector<16x8xf32>
    %41 = vector.shape_cast %40 : vector<16x8xf32> to vector<2x8x8xf32>
    %42 = vector.extract_strided_slice %27 {offsets = [0, 56], sizes = [16, 8], strides = [1, 1]} : vector<16x96xf32> to vector<16x8xf32>
    %43 = vector.shape_cast %42 : vector<16x8xf32> to vector<2x8x8xf32>
    %44 = vector.extract_strided_slice %27 {offsets = [0, 64], sizes = [16, 8], strides = [1, 1]} : vector<16x96xf32> to vector<16x8xf32>
    %45 = vector.shape_cast %44 : vector<16x8xf32> to vector<2x8x8xf32>
    %46 = vector.extract_strided_slice %27 {offsets = [0, 72], sizes = [16, 8], strides = [1, 1]} : vector<16x96xf32> to vector<16x8xf32>
    %47 = vector.shape_cast %46 : vector<16x8xf32> to vector<2x8x8xf32>
    %48 = vector.extract_strided_slice %27 {offsets = [0, 80], sizes = [16, 8], strides = [1, 1]} : vector<16x96xf32> to vector<16x8xf32>
    %49 = vector.shape_cast %48 : vector<16x8xf32> to vector<2x8x8xf32>
    %50 = vector.extract_strided_slice %27 {offsets = [0, 88], sizes = [16, 8], strides = [1, 1]} : vector<16x96xf32> to vector<16x8xf32>
    %51 = vector.shape_cast %50 : vector<16x8xf32> to vector<2x8x8xf32>
    %52 = tpu.concatenate %29, %35, %41, %47 in 0 : vector<2x8x8xf32>, vector<2x8x8xf32>, vector<2x8x8xf32>, vector<2x8x8xf32> -> vector<8x8x8xf32>
    %53 = tpu.concatenate %31, %37, %43, %49 in 0 : vector<2x8x8xf32>, vector<2x8x8xf32>, vector<2x8x8xf32>, vector<2x8x8xf32> -> vector<8x8x8xf32>
    %54 = tpu.concatenate %33, %39, %45, %51 in 0 : vector<2x8x8xf32>, vector<2x8x8xf32>, vector<2x8x8xf32>, vector<2x8x8xf32> -> vector<8x8x8xf32>
    "tpu.trace_start"() <{level = 10 : i32, message = "gqd,gkd->gqk"}> : () -> ()
    %cst_14 = arith.constant dense<0.000000e+00> : vector<8x8x8xf32>
    %55 = tpu.matmul %52, %53, %cst_14 {dimension_numbers = #tpu.dot_dimension_numbers<[2], [2], [1], [1], [0, 0, 0, 1, 1, 1], [0], [0]>} : vector<8x8x8xf32>, vector<8x8x8xf32>, vector<8x8x8xf32> -> vector<8x8x8xf32>
    "tpu.trace_stop"() : () -> ()
    %cst_15 = arith.constant 0.353553385 : f32
    %56 = vector.broadcast %cst_15 : f32 to vector<8x8x8xf32>
    %57 = arith.mulf %55, %56 : vector<8x8x8xf32>
    %58 = tpu.iota {dimensions = array<i32: 0>} : vector<8x8xi32>
    %59 = tpu.iota {dimensions = array<i32: 1>} : vector<8x8xi32>
    %60 = arith.cmpi sle, %59, %58 : vector<8x8xi32>
    %61 = vector.shape_cast %60 : vector<8x8xi1> to vector<1x8x8xi1>
    %cst_16 = arith.constant -1.000000e+30 : f32
    %62 = vector.shape_cast %61 : vector<1x8x8xi1> to vector<1x8x8xi1>
    %63 = vector.broadcast %62 : vector<1x8x8xi1> to vector<8x8x8xi1>
    %64 = vector.broadcast %cst_16 : f32 to vector<8x8x8xf32>
    %65 = arith.select %63, %57, %64 : vector<8x8x8xi1>, vector<8x8x8xf32>
    %cst_17 = arith.constant dense<0xFF800000> : vector<8x8xf32>
    %66 = vector.multi_reduction <maximumf>, %65, %cst_17 [2] : vector<8x8x8xf32> to vector<8x8xf32>
    %67 = vector.shape_cast %66 : vector<8x8xf32> to vector<8x8x1xf32>
    %68 = vector.broadcast %67 : vector<8x8x1xf32> to vector<8x8x8xf32>
    %69 = arith.subf %65, %68 : vector<8x8x8xf32>
    %70 = math.exp %69 : vector<8x8x8xf32>
    %cst_18 = arith.constant dense<0.000000e+00> : vector<8x8xf32>
    %71 = vector.multi_reduction <add>, %70, %cst_18 [2] : vector<8x8x8xf32> to vector<8x8xf32>
    %72 = vector.shape_cast %71 : vector<8x8xf32> to vector<8x8x1xf32>
    %73 = tpu.reciprocal %72 {approx = true} : vector<8x8x1xf32> -> vector<8x8x1xf32>
    %74 = vector.broadcast %73 : vector<8x8x1xf32> to vector<8x8x8xf32>
    %75 = arith.mulf %70, %74 : vector<8x8x8xf32>
    "tpu.trace_start"() <{level = 10 : i32, message = "gqk,gkd->gqd"}> : () -> ()
    %cst_19 = arith.constant dense<0.000000e+00> : vector<8x8x8xf32>
    %76 = tpu.matmul %75, %54, %cst_19 {dimension_numbers = #tpu.dot_dimension_numbers<[2], [1], [1], [2], [0, 0, 0, 1, 1, 2], [0], [0]>} : vector<8x8x8xf32>, vector<8x8x8xf32>, vector<8x8x8xf32> -> vector<8x8x8xf32>
    "tpu.trace_stop"() : () -> ()
    %77 = vector.extract_strided_slice %76 {offsets = [0, 0, 0], sizes = [2, 8, 8], strides = [1, 1, 1]} : vector<8x8x8xf32> to vector<2x8x8xf32>
    %78 = vector.shape_cast %77 : vector<2x8x8xf32> to vector<16x8xf32>
    %79 = vector.extract_strided_slice %76 {offsets = [2, 0, 0], sizes = [2, 8, 8], strides = [1, 1, 1]} : vector<8x8x8xf32> to vector<2x8x8xf32>
    %80 = vector.shape_cast %79 : vector<2x8x8xf32> to vector<16x8xf32>
    %81 = vector.extract_strided_slice %76 {offsets = [4, 0, 0], sizes = [2, 8, 8], strides = [1, 1, 1]} : vector<8x8x8xf32> to vector<2x8x8xf32>
    %82 = vector.shape_cast %81 : vector<2x8x8xf32> to vector<16x8xf32>
    %83 = vector.extract_strided_slice %76 {offsets = [6, 0, 0], sizes = [2, 8, 8], strides = [1, 1, 1]} : vector<8x8x8xf32> to vector<2x8x8xf32>
    %84 = vector.shape_cast %83 : vector<2x8x8xf32> to vector<16x8xf32>
    %85 = tpu.concatenate %78, %80, %82, %84 in 1 : vector<16x8xf32>, vector<16x8xf32>, vector<16x8xf32>, vector<16x8xf32> -> vector<16x32xf32>
    %c0_20 = arith.constant 0 : index
    %c0_21 = arith.constant 0 : index
    %86 = vector.load %arg5[%c0_20, %c0_21] : memref<32x32xf32, #tpu.memory_space<vmem>>, vector<32x32xf32>
    %cst_22 = arith.constant dense<0.000000e+00> : vector<16x32xf32>
    %87 = tpu.matmul %85, %86, %cst_22 {dimension_numbers = #tpu.dot_dimension_numbers<[1], [0], [0], [1], [0, 0, 1, 1], [], []>} : vector<16x32xf32>, vector<32x32xf32>, vector<16x32xf32> -> vector<16x32xf32>
    %c0_23 = arith.constant 0 : index
    %c0_24 = arith.constant 0 : index
    %88 = vector.load %arg6[%c0_23, %c0_24] : memref<1x32xf32, #tpu.memory_space<vmem>>, vector<1x32xf32>
    %89 = vector.broadcast %88 : vector<1x32xf32> to vector<16x32xf32>
    %90 = arith.addf %87, %89 : vector<16x32xf32>
    %91 = arith.addf %90, %0 : vector<16x32xf32>
    %c0_25 = arith.constant 0 : index
    %c0_26 = arith.constant 0 : index
    %92 = vector.load %arg7[%c0_25, %c0_26] : memref<1x32xf32, #tpu.memory_space<vmem>>, vector<1x32xf32>
    %c0_27 = arith.constant 0 : index
    %c0_28 = arith.constant 0 : index
    %93 = vector.load %arg8[%c0_27, %c0_28] : memref<1x32xf32, #tpu.memory_space<vmem>>, vector<1x32xf32>
    %cst_29 = arith.constant dense<0.000000e+00> : vector<16xf32>
    %94 = vector.multi_reduction <add>, %91, %cst_29 [1] : vector<16x32xf32> to vector<16xf32>
    %95 = vector.shape_cast %94 : vector<16xf32> to vector<16x1xf32>
    %cst_30 = arith.constant 3.200000e+01 : f32
    %96 = vector.broadcast %cst_30 : f32 to vector<16x1xf32>
    %97 = arith.divf %95, %96 : vector<16x1xf32>
    %98 = vector.broadcast %97 : vector<16x1xf32> to vector<16x32xf32>
    %99 = arith.subf %91, %98 : vector<16x32xf32>
    %100 = arith.mulf %99, %99 : vector<16x32xf32>
    %cst_31 = arith.constant dense<0.000000e+00> : vector<16xf32>
    %101 = vector.multi_reduction <add>, %100, %cst_31 [1] : vector<16x32xf32> to vector<16xf32>
    %102 = vector.shape_cast %101 : vector<16xf32> to vector<16x1xf32>
    %cst_32 = arith.constant 3.200000e+01 : f32
    %103 = vector.broadcast %cst_32 : f32 to vector<16x1xf32>
    %104 = arith.divf %102, %103 : vector<16x1xf32>
    %cst_33 = arith.constant 9.99999993E-9 : f32
    %105 = vector.broadcast %cst_33 : f32 to vector<16x1xf32>
    %106 = arith.addf %104, %105 : vector<16x1xf32>
    %107 = math.rsqrt %106 : vector<16x1xf32>
    %108 = vector.broadcast %107 : vector<16x1xf32> to vector<16x32xf32>
    %109 = arith.mulf %99, %108 : vector<16x32xf32>
    %110 = vector.broadcast %92 : vector<1x32xf32> to vector<16x32xf32>
    %111 = arith.mulf %110, %109 : vector<16x32xf32>
    %112 = vector.broadcast %93 : vector<1x32xf32> to vector<16x32xf32>
    %113 = arith.addf %111, %112 : vector<16x32xf32>
    %c0_34 = arith.constant 0 : index
    %c0_35 = arith.constant 0 : index
    %114 = vector.load %arg9[%c0_34, %c0_35] : memref<32x128xf32, #tpu.memory_space<vmem>>, vector<32x128xf32>
    %cst_36 = arith.constant dense<0.000000e+00> : vector<16x128xf32>
    %115 = tpu.matmul %113, %114, %cst_36 {dimension_numbers = #tpu.dot_dimension_numbers<[1], [0], [0], [1], [0, 0, 1, 1], [], []>} : vector<16x32xf32>, vector<32x128xf32>, vector<16x128xf32> -> vector<16x128xf32>
    %c0_37 = arith.constant 0 : index
    %c0_38 = arith.constant 0 : index
    %116 = vector.load %arg10[%c0_37, %c0_38] : memref<1x128xf32, #tpu.memory_space<vmem>>, vector<1x128xf32>
    %117 = vector.broadcast %116 : vector<1x128xf32> to vector<16x128xf32>
    %118 = arith.addf %115, %117 : vector<16x128xf32>
    %cst_39 = arith.constant 5.000000e-01 : f32
    %119 = vector.broadcast %cst_39 : f32 to vector<16x128xf32>
    %120 = arith.mulf %119, %118 : vector<16x128xf32>
    %cst_40 = arith.constant 4.471500e-02 : f32
    %121 = vector.broadcast %cst_40 : f32 to vector<16x128xf32>
    %122 = arith.mulf %121, %118 : vector<16x128xf32>
    %123 = arith.mulf %122, %118 : vector<16x128xf32>
    %124 = arith.mulf %123, %118 : vector<16x128xf32>
    %125 = arith.addf %118, %124 : vector<16x128xf32>
    %cst_41 = arith.constant 0.797884583 : f32
    %126 = vector.broadcast %cst_41 : f32 to vector<16x128xf32>
    %127 = arith.mulf %126, %125 : vector<16x128xf32>
    %128 = math.tanh %127 : vector<16x128xf32>
    %cst_42 = arith.constant 1.000000e+00 : f32
    %129 = vector.broadcast %cst_42 : f32 to vector<16x128xf32>
    %130 = arith.addf %129, %128 : vector<16x128xf32>
    %131 = arith.mulf %120, %130 : vector<16x128xf32>
    %c0_43 = arith.constant 0 : index
    %c0_44 = arith.constant 0 : index
    %132 = vector.load %arg11[%c0_43, %c0_44] : memref<128x32xf32, #tpu.memory_space<vmem>>, vector<128x32xf32>
    %cst_45 = arith.constant dense<0.000000e+00> : vector<16x32xf32>
    %133 = tpu.matmul %131, %132, %cst_45 {dimension_numbers = #tpu.dot_dimension_numbers<[1], [0], [0], [1], [0, 0, 1, 1], [], []>} : vector<16x128xf32>, vector<128x32xf32>, vector<16x32xf32> -> vector<16x32xf32>
    %c0_46 = arith.constant 0 : index
    %c0_47 = arith.constant 0 : index
    %134 = vector.load %arg12[%c0_46, %c0_47] : memref<1x32xf32, #tpu.memory_space<vmem>>, vector<1x32xf32>
    %135 = vector.broadcast %134 : vector<1x32xf32> to vector<16x32xf32>
    %136 = arith.addf %133, %135 : vector<16x32xf32>
    %137 = arith.addf %136, %91 : vector<16x32xf32>
    %c0_48 = arith.constant 0 : index
    %c0_49 = arith.constant 0 : index
    %138 = vector.load %arg13[%c0_48, %c0_49] : memref<16x32xf32, #tpu.memory_space<vmem>>, vector<16x32xf32>
    tpu.vector_store %arg13[%c0_48, %c0_49], %137 {strides = array<i32>} : memref<16x32xf32, #tpu.memory_space<vmem>>, vector<16x32xf32>,
    return
  }
}

</mosaic_0001>

<llo_original>
// kernel: tpu_custom_call.1
$region0: #{tpu_custom_call.1}
  #allocation0 [shape = 'u32[]', space=smem, size = 0x4, offset = 0x4, fixed_abs, tag = 'smem constant byte address 0x4 - core index']
  #allocation1 [shape = 'u32[144,128]{1,0:T(1,128)}', space=vmem, size = 0x12000, scoped, tag = 'internal scratch']
  %s0 = inlined_call_operand.vmem [shape: f32[16,32], index: 0, kind: input, shape index: {}]
  %s1 = inlined_call_operand.vmem [shape: f32[1,32], index: 1, kind: input, shape index: {}]
  %s2 = inlined_call_operand.vmem [shape: f32[1,32], index: 2, kind: input, shape index: {}]
  %s3 = inlined_call_operand.vmem [shape: f32[32,96], index: 3, kind: input, shape index: {}]
  %s4 = inlined_call_operand.vmem [shape: f32[1,96], index: 4, kind: input, shape index: {}]
  %s5 = inlined_call_operand.vmem [shape: f32[32,32], index: 5, kind: input, shape index: {}]
  %s6 = inlined_call_operand.vmem [shape: f32[1,32], index: 6, kind: input, shape index: {}]
  %s7 = inlined_call_operand.vmem [shape: f32[1,32], index: 7, kind: input, shape index: {}]
  %s8 = inlined_call_operand.vmem [shape: f32[1,32], index: 8, kind: input, shape index: {}]
  %s9 = inlined_call_operand.vmem [shape: f32[32,128], index: 9, kind: input, shape index: {}]
  %s10 = inlined_call_operand.vmem [shape: f32[1,128], index: 10, kind: input, shape index: {}]
  %s11 = inlined_call_operand.vmem [shape: f32[128,32], index: 11, kind: input, shape index: {}]
  %s12 = inlined_call_operand.vmem [shape: f32[1,32], index: 12, kind: input, shape index: {}]
  %s13 = inlined_call_operand.hbm [shape: f32[16,32], index: 13, kind: output, shape index: {}]
  %s14 = sld [smem:[#allocation0]]
  $region62: #{tpu_custom_call.1} parent=0
    _
  %s16 = ssub.s32 1, %s14
  %s17 = scalar_select 0, %s16, %s14
  $region1: #{tpu_custom_call.1} parent=0
    #allocation2 [shape = 'u8[8192]{0}', space=vmem, size = 0x2000, scoped, tag = 'output window, operand 0, single buffered']
    #allocation3 [shape = 's32[1]{0}', space=sflag, size = 0x4, scoped, tag = 'scoped memory for tpu_custom_call.1']
    %18 = vsyncpa [#allocation3], 0
    // Predicated region
    $region2: #{tpu_custom_call.1} parent=1 // pred_check
      _
    $region3: #{tpu_custom_call.1} parent=1 // pred_check_branch
      %20 = sbr.rel (0) target = $region5
    $region4: #{tpu_custom_call.1} parent=1 // pred_region
      _
    $region5: #{tpu_custom_call.1} parent=1 // pred_fallthru
      _
    // Predicated region
    $region6: #{tpu_custom_call.1} parent=1 // pred_check
      _
    $region7: #{tpu_custom_call.1} parent=1 // pred_check_branch
      %22 = sbr.rel (0) target = $region9
    $region8: #{tpu_custom_call.1} parent=1 // pred_region
      _
    $region9: #{tpu_custom_call.1} parent=1 // pred_fallthru
      _
    // Predicated region
    $region10: #{tpu_custom_call.1} parent=1 // pred_check
      _
    $region11: #{tpu_custom_call.1} parent=1 // pred_check_branch
      %24 = sbr.rel (0) target = $region13
    $region12: #{tpu_custom_call.1} parent=1 // pred_region
      _
    $region13: #{tpu_custom_call.1} parent=1 // pred_fallthru
      _
    // Predicated region
    $region14: #{tpu_custom_call.1} parent=1 // pred_check
      _
    $region15: #{tpu_custom_call.1} parent=1 // pred_check_branch
      %26 = sbr.rel (0) target = $region17
    $region16: #{tpu_custom_call.1} parent=1 // pred_region
      _
    $region17: #{tpu_custom_call.1} parent=1 // pred_fallthru
      _
    // Predicated region
    $region18: #{tpu_custom_call.1} parent=1 // pred_check
      _
    $region19: #{tpu_custom_call.1} parent=1 // pred_check_branch
      %28 = sbr.rel (0) target = $region21
    $region20: #{tpu_custom_call.1} parent=1 // pred_region
      _
    $region21: #{tpu_custom_call.1} parent=1 // pred_fallthru
      _
    // Predicated region
    $region22: #{tpu_custom_call.1} parent=1 // pred_check
      _
    $region23: #{tpu_custom_call.1} parent=1 // pred_check_branch
      %30 = sbr.rel (0) target = $region25
    $region24: #{tpu_custom_call.1} parent=1 // pred_region
      _
    $region25: #{tpu_custom_call.1} parent=1 // pred_fallthru
      _
    // Predicated region
    $region26: #{tpu_custom_call.1} parent=1 // pred_check
      _
    $region27: #{tpu_custom_call.1} parent=1 // pred_check_branch
      %32 = sbr.rel (0) target = $region29
    $region28: #{tpu_custom_call.1} parent=1 // pred_region
      _
    $region29: #{tpu_custom_call.1} parent=1 // pred_fallthru
      _
    // Predicated region
    $region30: #{tpu_custom_call.1} parent=1 // pred_check
      _
    $region31: #{tpu_custom_call.1} parent=1 // pred_check_branch
      %34 = sbr.rel (0) target = $region33
    $region32: #{tpu_custom_call.1} parent=1 // pred_region
      _
    $region33: #{tpu_custom_call.1} parent=1 // pred_fallthru
      _
    // Predicated region
    $region34: #{tpu_custom_call.1} parent=1 // pred_check
      _
    $region35: #{tpu_custom_call.1} parent=1 // pred_check_branch
      %36 = sbr.rel (0) target = $region37
    $region36: #{tpu_custom_call.1} parent=1 // pred_region
      _
    $region37: #{tpu_custom_call.1} parent=1 // pred_fallthru
      _
    // Predicated region
    $region38: #{tpu_custom_call.1} parent=1 // pred_check
      _
    $region39: #{tpu_custom_call.1} parent=1 // pred_check_branch
      %38 = sbr.rel (0) target = $region41
    $region40: #{tpu_custom_call.1} parent=1 // pred_region
      _
    $region41: #{tpu_custom_call.1} parent=1 // pred_fallthru
      _
    // Predicated region
    $region42: #{tpu_custom_call.1} parent=1 // pred_check
      _
    $region43: #{tpu_custom_call.1} parent=1 // pred_check_branch
      %40 = sbr.rel (0) target = $region45
    $region44: #{tpu_custom_call.1} parent=1 // pred_region
      _
    $region45: #{tpu_custom_call.1} parent=1 // pred_fallthru
      _
    // Predicated region
    $region46: #{tpu_custom_call.1} parent=1 // pred_check
      _
    $region47: #{tpu_custom_call.1} parent=1 // pred_check_branch
      %42 = sbr.rel (0) target = $region49
    $region48: #{tpu_custom_call.1} parent=1 // pred_region
      _
    $region49: #{tpu_custom_call.1} parent=1 // pred_fallthru
      _
    // Predicated region
    $region50: #{tpu_custom_call.1} parent=1 // pred_check
      _
    $region51: #{tpu_custom_call.1} parent=1 // pred_check_branch
      %44 = sbr.rel (0) target = $region53
    $region52: #{tpu_custom_call.1} parent=1 // pred_region
      _
    $region53: #{tpu_custom_call.1} parent=1 // pred_fallthru
      _
    %v45 = vld [vmem:[%s0] sm:$0xff]
    %v46 = vld [vmem:[%s0 + $0x8] sm:$0xff]
    %v47 = vld [vmem:[%s1] sm:$0x1]
    %v48 = vld [vmem:[%s2] sm:$0x1]
    %vm49 = vcmask 261120
    %v50 = vsel %vm49, %v45, 0.0
    %51 = vadd.xlane.f32.xlu0 %v50
    %v52 = vpop.xlane.xlu0 %51
    %v53 = vsel %vm49, %v46, 0.0
    %54 = vadd.xlane.f32.xlu0 %v53
    %v55 = vpop.xlane.xlu0 %54
    %v56 = vrcp.pop 32.0
    %v57 = vmul.f32 %v52, %v56
    %v58 = vmul.f32 %v55, %v56
    %v59 = vsub.f32 %v45, %v57
    %v60 = vsub.f32 %v46, %v58
    %v61 = vmul.f32 %v59, %v59
    %v62 = vmul.f32 %v60, %v60
    %v63 = vsel %vm49, %v61, 0.0
    %64 = vadd.xlane.f32.xlu0 %v63
    %v65 = vpop.xlane.xlu0 %64
    %v66 = vsel %vm49, %v62, 0.0
    %67 = vadd.xlane.f32.xlu0 %v66
    %v68 = vpop.xlane.xlu0 %67
    %v69 = vmul.f32 %v65, %v56
    %v70 = vmul.f32 %v68, %v56
    %v71 = vadd.f32 %v69, 1e-08
    %v72 = vadd.f32 %v70, 1e-08
    %v73 = vrsqrt.pop %v71
    %v74 = vrsqrt.pop %v72
    %v75 = vmul.f32 %v59, %v73
    %v76 = vmul.f32 %v60, %v74
    %v78 = vlaneseq
    %v79 = vshrl.u32 %v78, 7
    %v80 = vsub.s32 0, %v79
    %v81 = vrot.slane %v47, %v80
    %v83 = vmul.f32 %v81, %v75
    %v84 = vmul.f32 %v81, %v76
    %v86 = vlaneseq
    %v87 = vshrl.u32 %v86, 7
    %v88 = vsub.s32 0, %v87
    %v89 = vrot.slane %v48, %v88
    %v91 = vadd.f32 %v83, %v89
    %v92 = vadd.f32 %v84, %v89
    %v93 = vld [vmem:[%s3] sm:$0xff]
    %v94 = vld [vmem:[%s3 + $0x8] sm:$0xff]
    %v95 = vld [vmem:[%s3 + $0x10] sm:$0xff]
    %v96 = vld [vmem:[%s3 + $0x18] sm:$0xff]
    %v97 = vld [vmem:[%s4] sm:$0x1]
    %v99 = vlaneseq
    %v100 = vshrl.u32 %v99, 7
    %v101 = vsub.s32 0, %v100
    %v102 = vrot.slane %v97, %v101
    %v105 = vsel %vm49, %v91, 0
    %v108 = vsel %vm49, %v92, 0
    %110 = vmatprep.subr.mxu0 0.0
    %111 = vmatpush1.msra.mxu0 %v93
    %112 = vmatprep.subr.mxu0 0.0
    %113 = vmatpush1.msra.mxu0 %v94
    %114 = vmatprep.subr.mxu0 0.0
    %115 = vmatpush1.msra.mxu0 %v95
    %116 = vmatprep.subr.mxu0 0.0
    %117 = vmatpush1.msra.mxu0 %v96
    %118 = vmatprep.subr.mxu0 0.0
    %119 = vmatpush1.msra.mxu0 0.0
    %120 = vmatprep.subr.mxu0 0.0
    %121 = vmatpush1.msra.mxu0 0.0
    %122 = vmatprep.subr.mxu0 0.0
    %123 = vmatpush1.msra.mxu0 0.0
    %124 = vmatprep.subr.mxu0 0.0
    %125 = vmatpush1.msra.mxu0 0.0
    %126 = vmatprep.subr.mxu0 0.0
    %127 = vmatpush1.msra.mxu0 0.0
    %128 = vmatprep.subr.mxu0 0.0
    %129 = vmatpush1.msra.mxu0 0.0
    %130 = vmatprep.subr.mxu0 0.0
    %131 = vmatpush1.msra.mxu0 0.0
    %132 = vmatprep.subr.mxu0 0.0
    %133 = vmatpush1.msra.mxu0 0.0
    %134 = vmatprep.subr.mxu0 0.0
    %135 = vmatpush1.msra.mxu0 0.0
    %136 = vmatprep.subr.mxu0 0.0
    %137 = vmatpush1.msra.mxu0 0.0
    %138 = vmatprep.subr.mxu0 0.0
    %139 = vmatpush1.msra.mxu0 0.0
    %140 = vmatprep.subr.mxu0 0.0
    %141 = vmatpush1.msra.mxu0 0.0
    %142 = vmatprep.subr.mxu0 0.0
    %143 = vmatpush1.msra.mxu0 0.0
    %144 = vmatprep.subr.mxu0 0.0
    %145 = vmatpush1.msra.mxu0 0.0
    %146 = vmatprep.subr.mxu0 0.0
    %147 = vmatpush1.msra.mxu0 0.0
    %148 = vmatprep.subr.mxu0 0.0
    %149 = vmatpush1.msra.mxu0 0.0
    %150 = vmatprep.subr.mxu0 0.0
    %151 = vmatpush1.msra.mxu0 0.0
    %152 = vmatprep.subr.mxu0 0.0
    %153 = vmatpush1.msra.mxu0 0.0
    %154 = vmatprep.subr.mxu0 0.0
    %155 = vmatpush1.msra.mxu0 0.0
    %156 = vmatprep.subr.mxu0 0.0
    %157 = vmatpush1.msra.mxu0 0.0
    %158 = vmatprep.subr.mxu0 0.0
    %159 = vmatpush1.msra.mxu0 0.0
    %160 = vmatprep.subr.mxu0 0.0
    %161 = vmatpush1.msra.mxu0 0.0
    %162 = vmatprep.subr.mxu0 0.0
    %163 = vmatpush1.msra.mxu0 0.0
    %164 = vmatprep.subr.mxu0 0.0
    %165 = vmatpush1.msra.mxu0 0.0
    %166 = vmatprep.subr.mxu0 0.0
    %167 = vmatpush1.msra.mxu0 0.0
    %168 = vmatprep.subr.mxu0 0.0
    %169 = vmatpush1.msra.mxu0 0.0
    %170 = vmatprep.subr.mxu0 0.0
    %171 = vmatpush1.msra.mxu0 0.0
    %172 = vmatprep.subr.mxu0 0.0
    %173 = vmatpush1.msra.mxu0 0.0
    %174 = vmatprep.mubr.f32.mxu0 0.0
    %175 = vmatmul.mubr.f32.gmra.mrb[0].mxu0 %v105
    %v176 = vpop.f32.mrb[0].mxu0
    %v177 = vadd.f32 %v102, %v176
    %v178 = vpop.f32.mrb[0].mxu0
    %179 = vmatprep.mubr.f32.mxu0 0.0
    %180 = vmatmul.mubr.f32.gmra.mrb[0].mxu0 %v108
    %v181 = vpop.f32.mrb[0].mxu0
    %v182 = vadd.f32 %v102, %v181
    %v183 = vpop.f32.mrb[0].mxu0
    %184 = vdwg.mxu0
    %187 = vrot.lane.b32.xlu0 %v177, 104
    %v188 = vpop.permute.xlu0 %187
    %189 = vrot.lane.b32.xlu0 %v182, 104
    %v190 = vpop.permute.xlu0 %189
    %191 = vrot.lane.b32.xlu0 %v177, 80
    %v192 = vpop.permute.xlu0 %191
    %193 = vrot.lane.b32.xlu0 %v182, 80
    %v194 = vpop.permute.xlu0 %193
    %195 = vrot.lane.b32.xlu0 %v177, 56
    %v196 = vpop.permute.xlu0 %195
    %197 = vrot.lane.b32.xlu0 %v182, 56
    %v198 = vpop.permute.xlu0 %197
    %199 = vrot.lane.b32.xlu0 %v177, 120
    %v200 = vpop.permute.xlu0 %199
    %vm201 = vcmask 64512
    %v202 = vsel %vm201, %v177, 0
    %v204 = vsel %vm201, %v200, 0
    %206 = vmatprep.subr.mxu0 0.0
    %207 = vmatpush1.xpose.msra.mxu0 %v204
    %208 = vmatprep.subr.mxu0 0.0
    %209 = vmatpush1.xpose.msra.mxu0 0.0
    %210 = vmatprep.subr.mxu0 0.0
    %211 = vmatpush1.xpose.msra.mxu0 0.0
    %212 = vmatprep.subr.mxu0 0.0
    %213 = vmatpush1.xpose.msra.mxu0 0.0
    %214 = vmatprep.subr.mxu0 0.0
    %215 = vmatpush1.xpose.msra.mxu0 0.0
    %216 = vmatprep.subr.mxu0 0.0
    %217 = vmatpush1.xpose.msra.mxu0 0.0
    %218 = vmatprep.subr.mxu0 0.0
    %219 = vmatpush1.xpose.msra.mxu0 0.0
    %220 = vmatprep.subr.mxu0 0.0
    %221 = vmatpush1.xpose.msra.mxu0 0.0
    %222 = vmatprep.subr.mxu0 0.0
    %223 = vmatpush1.xpose.msra.mxu0 0.0
    %224 = vmatprep.subr.mxu0 0.0
    %225 = vmatpush1.xpose.msra.mxu0 0.0
    %226 = vmatprep.subr.mxu0 0.0
    %227 = vmatpush1.xpose.msra.mxu0 0.0
    %228 = vmatprep.subr.mxu0 0.0
    %229 = vmatpush1.xpose.msra.mxu0 0.0
    %230 = vmatprep.subr.mxu0 0.0
    %231 = vmatpush1.xpose.msra.mxu0 0.0
    %232 = vmatprep.subr.mxu0 0.0
    %233 = vmatpush1.xpose.msra.mxu0 0.0
    %234 = vmatprep.subr.mxu0 0.0
    %235 = vmatpush1.xpose.msra.mxu0 0.0
    %236 = vmatprep.subr.mxu0 0.0
    %237 = vmatpush1.xpose.msra.mxu0 0.0
    %238 = vmatprep.subr.mxu0 0.0
    %239 = vmatpush1.xpose.msra.mxu0 0.0
    %240 = vmatprep.subr.mxu0 0.0
    %241 = vmatpush1.xpose.msra.mxu0 0.0
    %242 = vmatprep.subr.mxu0 0.0
    %243 = vmatpush1.xpose.msra.mxu0 0.0
    %244 = vmatprep.subr.mxu0 0.0
    %245 = vmatpush1.xpose.msra.mxu0 0.0
    %246 = vmatprep.subr.mxu0 0.0
    %247 = vmatpush1.xpose.msra.mxu0 0.0
    %248 = vmatprep.subr.mxu0 0.0
    %249 = vmatpush1.xpose.msra.mxu0 0.0
    %250 = vmatprep.subr.mxu0 0.0
    %251 = vmatpush1.xpose.msra.mxu0 0.0
    %252 = vmatprep.subr.mxu0 0.0
    %253 = vmatpush1.xpose.msra.mxu0 0.0
    %254 = vmatprep.subr.mxu0 0.0
    %255 = vmatpush1.xpose.msra.mxu0 0.0
    %256 = vmatprep.subr.mxu0 0.0
    %257 = vmatpush1.xpose.msra.mxu0 0.0
    %258 = vmatprep.subr.mxu0 0.0
    %259 = vmatpush1.xpose.msra.mxu0 0.0
    %260 = vmatprep.subr.mxu0 0.0
    %261 = vmatpush1.xpose.msra.mxu0 0.0
    %262 = vmatprep.subr.mxu0 0.0
    %263 = vmatpush1.xpose.msra.mxu0 0.0
    %264 = vmatprep.subr.mxu0 0.0
    %265 = vmatpush1.xpose.msra.mxu0 0.0
    %266 = vmatprep.subr.mxu0 0.0
    %267 = vmatpush1.xpose.msra.mxu0 0.0
    %268 = vmatprep.subr.mxu0 0.0
    %269 = vmatpush1.xpose.msra.mxu0 0.0
    %270 = vmatprep.mubr.f32.mxu0 0.0
    %271 = vmatmul.mubr.f32.gmra.mrb[0].mxu0 %v202
    %v272 = vpop.f32.mrb[0].mxu0
    %v273 = vadd.f32 0.0, %v272
    %v274 = vpop.f32.mrb[0].mxu0
    %275 = vdwg.mxu0
    %276 = vrot.lane.b32.xlu0 %v182, 120
    %v277 = vpop.permute.xlu0 %276
    %v278 = vsel %vm201, %v182, 0
    %v280 = vsel %vm201, %v277, 0
    %282 = vmatprep.subr.mxu0 0.0
    %283 = vmatpush1.xpose.msra.mxu0 %v280
    %284 = vmatprep.subr.mxu0 0.0
    %285 = vmatpush1.xpose.msra.mxu0 0.0
    %286 = vmatprep.subr.mxu0 0.0
    %287 = vmatpush1.xpose.msra.mxu0 0.0
    %288 = vmatprep.subr.mxu0 0.0
    %289 = vmatpush1.xpose.msra.mxu0 0.0
    %290 = vmatprep.subr.mxu0 0.0
    %291 = vmatpush1.xpose.msra.mxu0 0.0
    %292 = vmatprep.subr.mxu0 0.0
    %293 = vmatpush1.xpose.msra.mxu0 0.0
    %294 = vmatprep.subr.mxu0 0.0
    %295 = vmatpush1.xpose.msra.mxu0 0.0
    %296 = vmatprep.subr.mxu0 0.0
    %297 = vmatpush1.xpose.msra.mxu0 0.0
    %298 = vmatprep.subr.mxu0 0.0
    %299 = vmatpush1.xpose.msra.mxu0 0.0
    %300 = vmatprep.subr.mxu0 0.0
    %301 = vmatpush1.xpose.msra.mxu0 0.0
    %302 = vmatprep.subr.mxu0 0.0
    %303 = vmatpush1.xpose.msra.mxu0 0.0
    %304 = vmatprep.subr.mxu0 0.0
    %305 = vmatpush1.xpose.msra.mxu0 0.0
    %306 = vmatprep.subr.mxu0 0.0
    %307 = vmatpush1.xpose.msra.mxu0 0.0
    %308 = vmatprep.subr.mxu0 0.0
    %309 = vmatpush1.xpose.msra.mxu0 0.0
    %310 = vmatprep.subr.mxu0 0.0
    %311 = vmatpush1.xpose.msra.mxu0 0.0
    %312 = vmatprep.subr.mxu0 0.0
    %313 = vmatpush1.xpose.msra.mxu0 0.0
    %314 = vmatprep.subr.mxu0 0.0
    %315 = vmatpush1.xpose.msra.mxu0 0.0
    %316 = vmatprep.subr.mxu0 0.0
    %317 = vmatpush1.xpose.msra.mxu0 0.0
    %318 = vmatprep.subr.mxu0 0.0
    %319 = vmatpush1.xpose.msra.mxu0 0.0
    %320 = vmatprep.subr.mxu0 0.0
    %321 = vmatpush1.xpose.msra.mxu0 0.0
    %322 = vmatprep.subr.mxu0 0.0
    %323 = vmatpush1.xpose.msra.mxu0 0.0
    %324 = vmatprep.subr.mxu0 0.0
    %325 = vmatpush1.xpose.msra.mxu0 0.0
    %326 = vmatprep.subr.mxu0 0.0
    %327 = vmatpush1.xpose.msra.mxu0 0.0
    %328 = vmatprep.subr.mxu0 0.0
    %329 = vmatpush1.xpose.msra.mxu0 0.0
    %330 = vmatprep.subr.mxu0 0.0
    %331 = vmatpush1.xpose.msra.mxu0 0.0
    %332 = vmatprep.subr.mxu0 0.0
    %333 = vmatpush1.xpose.msra.mxu0 0.0
    %334 = vmatprep.subr.mxu0 0.0
    %335 = vmatpush1.xpose.msra.mxu0 0.0
    %336 = vmatprep.subr.mxu0 0.0
    %337 = vmatpush1.xpose.msra.mxu0 0.0
    %338 = vmatprep.subr.mxu0 0.0
    %339 = vmatpush1.xpose.msra.mxu0 0.0
    %340 = vmatprep.subr.mxu0 0.0
    %341 = vmatpush1.xpose.msra.mxu0 0.0
    %342 = vmatprep.subr.mxu0 0.0
    %343 = vmatpush1.xpose.msra.mxu0 0.0
    %344 = vmatprep.subr.mxu0 0.0
    %345 = vmatpush1.xpose.msra.mxu0 0.0
    %346 = vmatprep.mubr.f32.mxu0 0.0
    %347 = vmatmul.mubr.f32.gmra.mrb[0].mxu0 %v278
    %v348 = vpop.f32.mrb[0].mxu0
    %v349 = vadd.f32 0.0, %v348
    %v350 = vpop.f32.mrb[0].mxu0
    %351 = vdwg.mxu0
    %352 = vrot.lane.b32.xlu0 %v188, 120
    %v353 = vpop.permute.xlu0 %352
    %v354 = vsel %vm201, %v188, 0
    %v356 = vsel %vm201, %v353, 0
    %358 = vmatprep.subr.mxu0 0.0
    %359 = vmatpush1.xpose.msra.mxu0 %v356
    %360 = vmatprep.subr.mxu0 0.0
    %361 = vmatpush1.xpose.msra.mxu0 0.0
    %362 = vmatprep.subr.mxu0 0.0
    %363 = vmatpush1.xpose.msra.mxu0 0.0
    %364 = vmatprep.subr.mxu0 0.0
    %365 = vmatpush1.xpose.msra.mxu0 0.0
    %366 = vmatprep.subr.mxu0 0.0
    %367 = vmatpush1.xpose.msra.mxu0 0.0
    %368 = vmatprep.subr.mxu0 0.0
    %369 = vmatpush1.xpose.msra.mxu0 0.0
    %370 = vmatprep.subr.mxu0 0.0
    %371 = vmatpush1.xpose.msra.mxu0 0.0
    %372 = vmatprep.subr.mxu0 0.0
    %373 = vmatpush1.xpose.msra.mxu0 0.0
    %374 = vmatprep.subr.mxu0 0.0
    %375 = vmatpush1.xpose.msra.mxu0 0.0
    %376 = vmatprep.subr.mxu0 0.0
    %377 = vmatpush1.xpose.msra.mxu0 0.0
    %378 = vmatprep.subr.mxu0 0.0
    %379 = vmatpush1.xpose.msra.mxu0 0.0
    %380 = vmatprep.subr.mxu0 0.0
    %381 = vmatpush1.xpose.msra.mxu0 0.0
    %382 = vmatprep.subr.mxu0 0.0
    %383 = vmatpush1.xpose.msra.mxu0 0.0
    %384 = vmatprep.subr.mxu0 0.0
    %385 = vmatpush1.xpose.msra.mxu0 0.0
    %386 = vmatprep.subr.mxu0 0.0
    %387 = vmatpush1.xpose.msra.mxu0 0.0
    %388 = vmatprep.subr.mxu0 0.0
    %389 = vmatpush1.xpose.msra.mxu0 0.0
    %390 = vmatprep.subr.mxu0 0.0
    %391 = vmatpush1.xpose.msra.mxu0 0.0
    %392 = vmatprep.subr.mxu0 0.0
    %393 = vmatpush1.xpose.msra.mxu0 0.0
    %394 = vmatprep.subr.mxu0 0.0
    %395 = vmatpush1.xpose.msra.mxu0 0.0
    %396 = vmatprep.subr.mxu0 0.0
    %397 = vmatpush1.xpose.msra.mxu0 0.0
    %398 = vmatprep.subr.mxu0 0.0
    %399 = vmatpush1.xpose.msra.mxu0 0.0
    %400 = vmatprep.subr.mxu0 0.0
    %401 = vmatpush1.xpose.msra.mxu0 0.0
    %402 = vmatprep.subr.mxu0 0.0
    %403 = vmatpush1.xpose.msra.mxu0 0.0
    %404 = vmatprep.subr.mxu0 0.0
    %405 = vmatpush1.xpose.msra.mxu0 0.0
    %406 = vmatprep.subr.mxu0 0.0
    %407 = vmatpush1.xpose.msra.mxu0 0.0
    %408 = vmatprep.subr.mxu0 0.0
    %409 = vmatpush1.xpose.msra.mxu0 0.0
    %410 = vmatprep.subr.mxu0 0.0
    %411 = vmatpush1.xpose.msra.mxu0 0.0
    %412 = vmatprep.subr.mxu0 0.0
    %413 = vmatpush1.xpose.msra.mxu0 0.0
    %414 = vmatprep.subr.mxu0 0.0
    %415 = vmatpush1.xpose.msra.mxu0 0.0
    %416 = vmatprep.subr.mxu0 0.0
    %417 = vmatpush1.xpose.msra.mxu0 0.0
    %418 = vmatprep.subr.mxu0 0.0
    %419 = vmatpush1.xpose.msra.mxu0 0.0
    %420 = vmatprep.subr.mxu0 0.0
    %421 = vmatpush1.xpose.msra.mxu0 0.0
    %422 = vmatprep.mubr.f32.mxu0 0.0
    %423 = vmatmul.mubr.f32.gmra.mrb[0].mxu0 %v354
    %v424 = vpop.f32.mrb[0].mxu0
    %v425 = vadd.f32 0.0, %v424
    %v426 = vpop.f32.mrb[0].mxu0
    %427 = vdwg.mxu0
    %428 = vrot.lane.b32.xlu0 %v190, 120
    %v429 = vpop.permute.xlu0 %428
    %v430 = vsel %vm201, %v190, 0
    %v432 = vsel %vm201, %v429, 0
    %434 = vmatprep.subr.mxu0 0.0
    %435 = vmatpush1.xpose.msra.mxu0 %v432
    %436 = vmatprep.subr.mxu0 0.0
    %437 = vmatpush1.xpose.msra.mxu0 0.0
    %438 = vmatprep.subr.mxu0 0.0
    %439 = vmatpush1.xpose.msra.mxu0 0.0
    %440 = vmatprep.subr.mxu0 0.0
    %441 = vmatpush1.xpose.msra.mxu0 0.0
    %442 = vmatprep.subr.mxu0 0.0
    %443 = vmatpush1.xpose.msra.mxu0 0.0
    %444 = vmatprep.subr.mxu0 0.0
    %445 = vmatpush1.xpose.msra.mxu0 0.0
    %446 = vmatprep.subr.mxu0 0.0
    %447 = vmatpush1.xpose.msra.mxu0 0.0
    %448 = vmatprep.subr.mxu0 0.0
    %449 = vmatpush1.xpose.msra.mxu0 0.0
    %450 = vmatprep.subr.mxu0 0.0
    %451 = vmatpush1.xpose.msra.mxu0 0.0
    %452 = vmatprep.subr.mxu0 0.0
    %453 = vmatpush1.xpose.msra.mxu0 0.0
    %454 = vmatprep.subr.mxu0 0.0
    %455 = vmatpush1.xpose.msra.mxu0 0.0
    %456 = vmatprep.subr.mxu0 0.0
    %457 = vmatpush1.xpose.msra.mxu0 0.0
    %458 = vmatprep.subr.mxu0 0.0
    %459 = vmatpush1.xpose.msra.mxu0 0.0
    %460 = vmatprep.subr.mxu0 0.0
    %461 = vmatpush1.xpose.msra.mxu0 0.0
    %462 = vmatprep.subr.mxu0 0.0
    %463 = vmatpush1.xpose.msra.mxu0 0.0
    %464 = vmatprep.subr.mxu0 0.0
    %465 = vmatpush1.xpose.msra.mxu0 0.0
    %466 = vmatprep.subr.mxu0 0.0
    %467 = vmatpush1.xpose.msra.mxu0 0.0
    %468 = vmatprep.subr.mxu0 0.0
    %469 = vmatpush1.xpose.msra.mxu0 0.0
    %470 = vmatprep.subr.mxu0 0.0
    %471 = vmatpush1.xpose.msra.mxu0 0.0
    %472 = vmatprep.subr.mxu0 0.0
    %473 = vmatpush1.xpose.msra.mxu0 0.0
    %474 = vmatprep.subr.mxu0 0.0
    %475 = vmatpush1.xpose.msra.mxu0 0.0
    %476 = vmatprep.subr.mxu0 0.0
    %477 = vmatpush1.xpose.msra.mxu0 0.0
    %478 = vmatprep.subr.mxu0 0.0
    %479 = vmatpush1.xpose.msra.mxu0 0.0
    %480 = vmatprep.subr.mxu0 0.0
    %481 = vmatpush1.xpose.msra.mxu0 0.0
    %482 = vmatprep.subr.mxu0 0.0
    %483 = vmatpush1.xpose.msra.mxu0 0.0
    %484 = vmatprep.subr.mxu0 0.0
    %485 = vmatpush1.xpose.msra.mxu0 0.0
    %486 = vmatprep.subr.mxu0 0.0
    %487 = vmatpush1.xpose.msra.mxu0 0.0
    %488 = vmatprep.subr.mxu0 0.0
    %489 = vmatpush1.xpose.msra.mxu0 0.0
    %490 = vmatprep.subr.mxu0 0.0
    %491 = vmatpush1.xpose.msra.mxu0 0.0
    %492 = vmatprep.subr.mxu0 0.0
    %493 = vmatpush1.xpose.msra.mxu0 0.0
    %494 = vmatprep.subr.mxu0 0.0
    %495 = vmatpush1.xpose.msra.mxu0 0.0
    %496 = vmatprep.subr.mxu0 0.0
    %497 = vmatpush1.xpose.msra.mxu0 0.0
    %498 = vmatprep.mubr.f32.mxu0 0.0
    %499 = vmatmul.mubr.f32.gmra.mrb[0].mxu0 %v430
    %v500 = vpop.f32.mrb[0].mxu0
    %v501 = vadd.f32 0.0, %v500
    %v502 = vpop.f32.mrb[0].mxu0
    %503 = vdwg.mxu0
    %504 = vrot.lane.b32.xlu0 %v192, 120
    %v505 = vpop.permute.xlu0 %504
    %v506 = vsel %vm201, %v192, 0
    %v508 = vsel %vm201, %v505, 0
    %510 = vmatprep.subr.mxu0 0.0
    %511 = vmatpush1.xpose.msra.mxu0 %v508
    %512 = vmatprep.subr.mxu0 0.0
    %513 = vmatpush1.xpose.msra.mxu0 0.0
    %514 = vmatprep.subr.mxu0 0.0
    %515 = vmatpush1.xpose.msra.mxu0 0.0
    %516 = vmatprep.subr.mxu0 0.0
    %517 = vmatpush1.xpose.msra.mxu0 0.0
    %518 = vmatprep.subr.mxu0 0.0
    %519 = vmatpush1.xpose.msra.mxu0 0.0
    %520 = vmatprep.subr.mxu0 0.0
    %521 = vmatpush1.xpose.msra.mxu0 0.0
    %522 = vmatprep.subr.mxu0 0.0
    %523 = vmatpush1.xpose.msra.mxu0 0.0
    %524 = vmatprep.subr.mxu0 0.0
    %525 = vmatpush1.xpose.msra.mxu0 0.0
    %526 = vmatprep.subr.mxu0 0.0
    %527 = vmatpush1.xpose.msra.mxu0 0.0
    %528 = vmatprep.subr.mxu0 0.0
    %529 = vmatpush1.xpose.msra.mxu0 0.0
    %530 = vmatprep.subr.mxu0 0.0
    %531 = vmatpush1.xpose.msra.mxu0 0.0
    %532 = vmatprep.subr.mxu0 0.0
    %533 = vmatpush1.xpose.msra.mxu0 0.0
    %534 = vmatprep.subr.mxu0 0.0
    %535 = vmatpush1.xpose.msra.mxu0 0.0
    %536 = vmatprep.subr.mxu0 0.0
    %537 = vmatpush1.xpose.msra.mxu0 0.0
    %538 = vmatprep.subr.mxu0 0.0
    %539 = vmatpush1.xpose.msra.mxu0 0.0
    %540 = vmatprep.subr.mxu0 0.0
    %541 = vmatpush1.xpose.msra.mxu0 0.0
    %542 = vmatprep.subr.mxu0 0.0
    %543 = vmatpush1.xpose.msra.mxu0 0.0
    %544 = vmatprep.subr.mxu0 0.0
    %545 = vmatpush1.xpose.msra.mxu0 0.0
    %546 = vmatprep.subr.mxu0 0.0
    %547 = vmatpush1.xpose.msra.mxu0 0.0
    %548 = vmatprep.subr.mxu0 0.0
    %549 = vmatpush1.xpose.msra.mxu0 0.0
    %550 = vmatprep.subr.mxu0 0.0
    %551 = vmatpush1.xpose.msra.mxu0 0.0
    %552 = vmatprep.subr.mxu0 0.0
    %553 = vmatpush1.xpose.msra.mxu0 0.0
    %554 = vmatprep.subr.mxu0 0.0
    %555 = vmatpush1.xpose.msra.mxu0 0.0
    %556 = vmatprep.subr.mxu0 0.0
    %557 = vmatpush1.xpose.msra.mxu0 0.0
    %558 = vmatprep.subr.mxu0 0.0
    %559 = vmatpush1.xpose.msra.mxu0 0.0
    %560 = vmatprep.subr.mxu0 0.0
    %561 = vmatpush1.xpose.msra.mxu0 0.0
    %562 = vmatprep.subr.mxu0 0.0
    %563 = vmatpush1.xpose.msra.mxu0 0.0
    %564 = vmatprep.subr.mxu0 0.0
    %565 = vmatpush1.xpose.msra.mxu0 0.0
    %566 = vmatprep.subr.mxu0 0.0
    %567 = vmatpush1.xpose.msra.mxu0 0.0
    %568 = vmatprep.subr.mxu0 0.0
    %569 = vmatpush1.xpose.msra.mxu0 0.0
    %570 = vmatprep.subr.mxu0 0.0
    %571 = vmatpush1.xpose.msra.mxu0 0.0
    %572 = vmatprep.subr.mxu0 0.0
    %573 = vmatpush1.xpose.msra.mxu0 0.0
    %574 = vmatprep.mubr.f32.mxu0 0.0
    %575 = vmatmul.mubr.f32.gmra.mrb[0].mxu0 %v506
    %v576 = vpop.f32.mrb[0].mxu0
    %v577 = vadd.f32 0.0, %v576
    %v578 = vpop.f32.mrb[0].mxu0
    %579 = vdwg.mxu0
    %580 = vrot.lane.b32.xlu0 %v194, 120
    %v581 = vpop.permute.xlu0 %580
    %v582 = vsel %vm201, %v194, 0
    %v584 = vsel %vm201, %v581, 0
    %586 = vmatprep.subr.mxu0 0.0
    %587 = vmatpush1.xpose.msra.mxu0 %v584
    %588 = vmatprep.subr.mxu0 0.0
    %589 = vmatpush1.xpose.msra.mxu0 0.0
    %590 = vmatprep.subr.mxu0 0.0
    %591 = vmatpush1.xpose.msra.mxu0 0.0
    %592 = vmatprep.subr.mxu0 0.0
    %593 = vmatpush1.xpose.msra.mxu0 0.0
    %594 = vmatprep.subr.mxu0 0.0
    %595 = vmatpush1.xpose.msra.mxu0 0.0
    %596 = vmatprep.subr.mxu0 0.0
    %597 = vmatpush1.xpose.msra.mxu0 0.0
    %598 = vmatprep.subr.mxu0 0.0
    %599 = vmatpush1.xpose.msra.mxu0 0.0
    %600 = vmatprep.subr.mxu0 0.0
    %601 = vmatpush1.xpose.msra.mxu0 0.0
    %602 = vmatprep.subr.mxu0 0.0
    %603 = vmatpush1.xpose.msra.mxu0 0.0
    %604 = vmatprep.subr.mxu0 0.0
    %605 = vmatpush1.xpose.msra.mxu0 0.0
    %606 = vmatprep.subr.mxu0 0.0
    %607 = vmatpush1.xpose.msra.mxu0 0.0
    %608 = vmatprep.subr.mxu0 0.0
    %609 = vmatpush1.xpose.msra.mxu0 0.0
    %610 = vmatprep.subr.mxu0 0.0
    %611 = vmatpush1.xpose.msra.mxu0 0.0
    %612 = vmatprep.subr.mxu0 0.0
    %613 = vmatpush1.xpose.msra.mxu0 0.0
    %614 = vmatprep.subr.mxu0 0.0
    %615 = vmatpush1.xpose.msra.mxu0 0.0
    %616 = vmatprep.subr.mxu0 0.0
    %617 = vmatpush1.xpose.msra.mxu0 0.0
    %618 = vmatprep.subr.mxu0 0.0
    %619 = vmatpush1.xpose.msra.mxu0 0.0
    %620 = vmatprep.subr.mxu0 0.0
    %621 = vmatpush1.xpose.msra.mxu0 0.0
    %622 = vmatprep.subr.mxu0 0.0
    %623 = vmatpush1.xpose.msra.mxu0 0.0
    %624 = vmatprep.subr.mxu0 0.0
    %625 = vmatpush1.xpose.msra.mxu0 0.0
    %626 = vmatprep.subr.mxu0 0.0
    %627 = vmatpush1.xpose.msra.mxu0 0.0
    %628 = vmatprep.subr.mxu0 0.0
    %629 = vmatpush1.xpose.msra.mxu0 0.0
    %630 = vmatprep.subr.mxu0 0.0
    %631 = vmatpush1.xpose.msra.mxu0 0.0
    %632 = vmatprep.subr.mxu0 0.0
    %633 = vmatpush1.xpose.msra.mxu0 0.0
    %634 = vmatprep.subr.mxu0 0.0
    %635 = vmatpush1.xpose.msra.mxu0 0.0
    %636 = vmatprep.subr.mxu0 0.0
    %637 = vmatpush1.xpose.msra.mxu0 0.0
    %638 = vmatprep.subr.mxu0 0.0
    %639 = vmatpush1.xpose.msra.mxu0 0.0
    %640 = vmatprep.subr.mxu0 0.0
    %641 = vmatpush1.xpose.msra.mxu0 0.0
    %642 = vmatprep.subr.mxu0 0.0
    %643 = vmatpush1.xpose.msra.mxu0 0.0
    %644 = vmatprep.subr.mxu0 0.0
    %645 = vmatpush1.xpose.msra.mxu0 0.0
    %646 = vmatprep.subr.mxu0 0.0
    %647 = vmatpush1.xpose.msra.mxu0 0.0
    %648 = vmatprep.subr.mxu0 0.0
    %649 = vmatpush1.xpose.msra.mxu0 0.0
    %650 = vmatprep.mubr.f32.mxu0 0.0
    %651 = vmatmul.mubr.f32.gmra.mrb[0].mxu0 %v582
    %v652 = vpop.f32.mrb[0].mxu0
    %v653 = vadd.f32 0.0, %v652
    %v654 = vpop.f32.mrb[0].mxu0
    %655 = vdwg.mxu0
    %656 = vrot.lane.b32.xlu0 %v196, 120
    %v657 = vpop.permute.xlu0 %656
    %v658 = vsel %vm201, %v196, 0
    %v660 = vsel %vm201, %v657, 0
    %662 = vmatprep.subr.mxu0 0.0
    %663 = vmatpush1.xpose.msra.mxu0 %v660
    %664 = vmatprep.subr.mxu0 0.0
    %665 = vmatpush1.xpose.msra.mxu0 0.0
    %666 = vmatprep.subr.mxu0 0.0
    %667 = vmatpush1.xpose.msra.mxu0 0.0
    %668 = vmatprep.subr.mxu0 0.0
    %669 = vmatpush1.xpose.msra.mxu0 0.0
    %670 = vmatprep.subr.mxu0 0.0
    %671 = vmatpush1.xpose.msra.mxu0 0.0
    %672 = vmatprep.subr.mxu0 0.0
    %673 = vmatpush1.xpose.msra.mxu0 0.0
    %674 = vmatprep.subr.mxu0 0.0
    %675 = vmatpush1.xpose.msra.mxu0 0.0
    %676 = vmatprep.subr.mxu0 0.0
    %677 = vmatpush1.xpose.msra.mxu0 0.0
    %678 = vmatprep.subr.mxu0 0.0
    %679 = vmatpush1.xpose.msra.mxu0 0.0
    %680 = vmatprep.subr.mxu0 0.0
    %681 = vmatpush1.xpose.msra.mxu0 0.0
    %682 = vmatprep.subr.mxu0 0.0
    %683 = vmatpush1.xpose.msra.mxu0 0.0
    %684 = vmatprep.subr.mxu0 0.0
    %685 = vmatpush1.xpose.msra.mxu0 0.0
    %686 = vmatprep.subr.mxu0 0.0
    %687 = vmatpush1.xpose.msra.mxu0 0.0
    %688 = vmatprep.subr.mxu0 0.0
    %689 = vmatpush1.xpose.msra.mxu0 0.0
    %690 = vmatprep.subr.mxu0 0.0
    %691 = vmatpush1.xpose.msra.mxu0 0.0
    %692 = vmatprep.subr.mxu0 0.0
    %693 = vmatpush1.xpose.msra.mxu0 0.0
    %694 = vmatprep.subr.mxu0 0.0
    %695 = vmatpush1.xpose.msra.mxu0 0.0
    %696 = vmatprep.subr.mxu0 0.0
    %697 = vmatpush1.xpose.msra.mxu0 0.0
    %698 = vmatprep.subr.mxu0 0.0
    %699 = vmatpush1.xpose.msra.mxu0 0.0
    %700 = vmatprep.subr.mxu0 0.0
    %701 = vmatpush1.xpose.msra.mxu0 0.0
    %702 = vmatprep.subr.mxu0 0.0
    %703 = vmatpush1.xpose.msra.mxu0 0.0
    %704 = vmatprep.subr.mxu0 0.0
    %705 = vmatpush1.xpose.msra.mxu0 0.0
    %706 = vmatprep.subr.mxu0 0.0
    %707 = vmatpush1.xpose.msra.mxu0 0.0
    %708 = vmatprep.subr.mxu0 0.0
    %709 = vmatpush1.xpose.msra.mxu0 0.0
    %710 = vmatprep.subr.mxu0 0.0
    %711 = vmatpush1.xpose.msra.mxu0 0.0
    %712 = vmatprep.subr.mxu0 0.0
    %713 = vmatpush1.xpose.msra.mxu0 0.0
    %714 = vmatprep.subr.mxu0 0.0
    %715 = vmatpush1.xpose.msra.mxu0 0.0
    %716 = vmatprep.subr.mxu0 0.0
    %717 = vmatpush1.xpose.msra.mxu0 0.0
    %718 = vmatprep.subr.mxu0 0.0
    %719 = vmatpush1.xpose.msra.mxu0 0.0
    %720 = vmatprep.subr.mxu0 0.0
    %721 = vmatpush1.xpose.msra.mxu0 0.0
    %722 = vmatprep.subr.mxu0 0.0
    %723 = vmatpush1.xpose.msra.mxu0 0.0
    %724 = vmatprep.subr.mxu0 0.0
    %725 = vmatpush1.xpose.msra.mxu0 0.0
    %726 = vmatprep.mubr.f32.mxu0 0.0
    %727 = vmatmul.mubr.f32.gmra.mrb[0].mxu0 %v658
    %v728 = vpop.f32.mrb[0].mxu0
    %v729 = vadd.f32 0.0, %v728
    %v730 = vpop.f32.mrb[0].mxu0
    %731 = vdwg.mxu0
    %732 = vrot.lane.b32.xlu0 %v198, 120
    %v733 = vpop.permute.xlu0 %732
    %v734 = vsel %vm201, %v198, 0
    %v736 = vsel %vm201, %v733, 0
    %738 = vmatprep.subr.mxu0 0.0
    %739 = vmatpush1.xpose.msra.mxu0 %v736
    %740 = vmatprep.subr.mxu0 0.0
    %741 = vmatpush1.xpose.msra.mxu0 0.0
    %742 = vmatprep.subr.mxu0 0.0
    %743 = vmatpush1.xpose.msra.mxu0 0.0
    %744 = vmatprep.subr.mxu0 0.0
    %745 = vmatpush1.xpose.msra.mxu0 0.0
    %746 = vmatprep.subr.mxu0 0.0
    %747 = vmatpush1.xpose.msra.mxu0 0.0
    %748 = vmatprep.subr.mxu0 0.0
    %749 = vmatpush1.xpose.msra.mxu0 0.0
    %750 = vmatprep.subr.mxu0 0.0
    %751 = vmatpush1.xpose.msra.mxu0 0.0
    %752 = vmatprep.subr.mxu0 0.0
    %753 = vmatpush1.xpose.msra.mxu0 0.0
    %754 = vmatprep.subr.mxu0 0.0
    %755 = vmatpush1.xpose.msra.mxu0 0.0
    %756 = vmatprep.subr.mxu0 0.0
    %757 = vmatpush1.xpose.msra.mxu0 0.0
    %758 = vmatprep.subr.mxu0 0.0
    %759 = vmatpush1.xpose.msra.mxu0 0.0
    %760 = vmatprep.subr.mxu0 0.0
    %761 = vmatpush1.xpose.msra.mxu0 0.0
    %762 = vmatprep.subr.mxu0 0.0
    %763 = vmatpush1.xpose.msra.mxu0 0.0
    %764 = vmatprep.subr.mxu0 0.0
    %765 = vmatpush1.xpose.msra.mxu0 0.0
    %766 = vmatprep.subr.mxu0 0.0
    %767 = vmatpush1.xpose.msra.mxu0 0.0
    %768 = vmatprep.subr.mxu0 0.0
    %769 = vmatpush1.xpose.msra.mxu0 0.0
    %770 = vmatprep.subr.mxu0 0.0
    %771 = vmatpush1.xpose.msra.mxu0 0.0
    %772 = vmatprep.subr.mxu0 0.0
    %773 = vmatpush1.xpose.msra.mxu0 0.0
    %774 = vmatprep.subr.mxu0 0.0
    %775 = vmatpush1.xpose.msra.mxu0 0.0
    %776 = vmatprep.subr.mxu0 0.0
    %777 = vmatpush1.xpose.msra.mxu0 0.0
    %778 = vmatprep.subr.mxu0 0.0
    %779 = vmatpush1.xpose.msra.mxu0 0.0
    %780 = vmatprep.subr.mxu0 0.0
    %781 = vmatpush1.xpose.msra.mxu0 0.0
    %782 = vmatprep.subr.mxu0 0.0
    %783 = vmatpush1.xpose.msra.mxu0 0.0
    %784 = vmatprep.subr.mxu0 0.0
    %785 = vmatpush1.xpose.msra.mxu0 0.0
    %786 = vmatprep.subr.mxu0 0.0
    %787 = vmatpush1.xpose.msra.mxu0 0.0
    %788 = vmatprep.subr.mxu0 0.0
    %789 = vmatpush1.xpose.msra.mxu0 0.0
    %790 = vmatprep.subr.mxu0 0.0
    %791 = vmatpush1.xpose.msra.mxu0 0.0
    %792 = vmatprep.subr.mxu0 0.0
    %793 = vmatpush1.xpose.msra.mxu0 0.0
    %794 = vmatprep.subr.mxu0 0.0
    %795 = vmatpush1.xpose.msra.mxu0 0.0
    %796 = vmatprep.subr.mxu0 0.0
    %797 = vmatpush1.xpose.msra.mxu0 0.0
    %798 = vmatprep.subr.mxu0 0.0
    %799 = vmatpush1.xpose.msra.mxu0 0.0
    %800 = vmatprep.subr.mxu0 0.0
    %801 = vmatpush1.xpose.msra.mxu0 0.0
    %802 = vmatprep.mubr.f32.mxu0 0.0
    %803 = vmatmul.mubr.f32.gmra.mrb[0].mxu0 %v734
    %v804 = vpop.f32.mrb[0].mxu0
    %v805 = vadd.f32 0.0, %v804
    %v806 = vpop.f32.mrb[0].mxu0
    %807 = vdwg.mxu0
    %v808 = vmul.f32 %v273, 0.35355338
    %v809 = vmul.f32 %v349, 0.35355338
    %v810 = vmul.f32 %v425, 0.35355338
    %v811 = vmul.f32 %v501, 0.35355338
    %v812 = vmul.f32 %v577, 0.35355338
    %v813 = vmul.f32 %v653, 0.35355338
    %v814 = vmul.f32 %v729, 0.35355338
    %v815 = vmul.f32 %v805, 0.35355338
    %v816 = vlaneseq
    %v817 = vshrl.u32 %v816, 7
    %v818 = vlaneseq
    %v819 = vand.u32 %v818, 127
    %vm820 = vcmp.le.s32.totalorder %v819, %v817
    %v821 = vsel %vm820, 1, 0
    %vm822 = vcmp.eq.s32.totalorder %v821, 1
    %v823 = vsel %vm822, %v808, -1e+30
    %v824 = vsel %vm822, %v809, -1e+30
    %v825 = vsel %vm822, %v810, -1e+30
    %v826 = vsel %vm822, %v811, -1e+30
    %v827 = vsel %vm822, %v812, -1e+30
    %v828 = vsel %vm822, %v813, -1e+30
    %v829 = vsel %vm822, %v814, -1e+30
    %v830 = vsel %vm822, %v815, -1e+30
    %v831 = vsel %vm201, %v823, -inf
    %832 = vmax.xlane.f32.xlu0 %v831
    %v833 = vpop.xlane.xlu0 %832
    %v834 = vsel %vm201, %v824, -inf
    %835 = vmax.xlane.f32.xlu0 %v834
    %v836 = vpop.xlane.xlu0 %835
    %v837 = vsel %vm201, %v825, -inf
    %838 = vmax.xlane.f32.xlu0 %v837
    %v839 = vpop.xlane.xlu0 %838
    %v840 = vsel %vm201, %v826, -inf
    %841 = vmax.xlane.f32.xlu0 %v840
    %v842 = vpop.xlane.xlu0 %841
    %v843 = vsel %vm201, %v827, -inf
    %844 = vmax.xlane.f32.xlu0 %v843
    %v845 = vpop.xlane.xlu0 %844
    %v846 = vsel %vm201, %v828, -inf
    %847 = vmax.xlane.f32.xlu0 %v846
    %v848 = vpop.xlane.xlu0 %847
    %v849 = vsel %vm201, %v829, -inf
    %850 = vmax.xlane.f32.xlu0 %v849
    %v851 = vpop.xlane.xlu0 %850
    %v852 = vsel %vm201, %v830, -inf
    %853 = vmax.xlane.f32.xlu0 %v852
    %v854 = vpop.xlane.xlu0 %853
    %v855 = vsub.f32 %v823, %v833
    %v856 = vsub.f32 %v824, %v836
    %v857 = vsub.f32 %v825, %v839
    %v858 = vsub.f32 %v826, %v842
    %v859 = vsub.f32 %v827, %v845
    %v860 = vsub.f32 %v828, %v848
    %v861 = vsub.f32 %v829, %v851
    %v862 = vsub.f32 %v830, %v854
    %v863 = vmul.f32 %v855, 1.442695
    %v864 = vpow.pop %v863
    %v865 = vmul.f32 %v856, 1.442695
    %v866 = vpow.pop %v865
    %v867 = vmul.f32 %v857, 1.442695
    %v868 = vpow.pop %v867
    %v869 = vmul.f32 %v858, 1.442695
    %v870 = vpow.pop %v869
    %v871 = vmul.f32 %v859, 1.442695
    %v872 = vpow.pop %v871
    %v873 = vmul.f32 %v860, 1.442695
    %v874 = vpow.pop %v873
    %v875 = vmul.f32 %v861, 1.442695
    %v876 = vpow.pop %v875
    %v877 = vmul.f32 %v862, 1.442695
    %v878 = vpow.pop %v877
    %v879 = vsel %vm201, %v864, 0.0
    %880 = vadd.xlane.f32.xlu0 %v879
    %v881 = vpop.xlane.xlu0 %880
    %v882 = vsel %vm201, %v866, 0.0
    %883 = vadd.xlane.f32.xlu0 %v882
    %v884 = vpop.xlane.xlu0 %883
    %v885 = vsel %vm201, %v868, 0.0
    %886 = vadd.xlane.f32.xlu0 %v885
    %v887 = vpop.xlane.xlu0 %886
    %v888 = vsel %vm201, %v870, 0.0
    %889 = vadd.xlane.f32.xlu0 %v888
    %v890 = vpop.xlane.xlu0 %889
    %v891 = vsel %vm201, %v872, 0.0
    %892 = vadd.xlane.f32.xlu0 %v891
    %v893 = vpop.xlane.xlu0 %892
    %v894 = vsel %vm201, %v874, 0.0
    %895 = vadd.xlane.f32.xlu0 %v894
    %v896 = vpop.xlane.xlu0 %895
    %v897 = vsel %vm201, %v876, 0.0
    %898 = vadd.xlane.f32.xlu0 %v897
    %v899 = vpop.xlane.xlu0 %898
    %v900 = vsel %vm201, %v878, 0.0
    %901 = vadd.xlane.f32.xlu0 %v900
    %v902 = vpop.xlane.xlu0 %901
    %v903 = vrcp.pop %v881
    %v904 = vrcp.pop %v884
    %v905 = vrcp.pop %v887
    %v906 = vrcp.pop %v890
    %v907 = vrcp.pop %v893
    %v908 = vrcp.pop %v896
    %v909 = vrcp.pop %v899
    %v910 = vrcp.pop %v902
    %v911 = vmul.f32 %v864, %v903
    %v912 = vmul.f32 %v866, %v904
    %v913 = vmul.f32 %v868, %v905
    %v914 = vmul.f32 %v870, %v906
    %v915 = vmul.f32 %v872, %v907
    %v916 = vmul.f32 %v874, %v908
    %v917 = vmul.f32 %v876, %v909
    %v918 = vmul.f32 %v878, %v910
    %919 = vrot.lane.b32.xlu0 %v177, 112
    %v920 = vpop.permute.xlu0 %919
    %v923 = vsel %vm201, %v911, 0
    %925 = vmatprep.subr.mxu0 0.0
    %926 = vmatpush1.msra.mxu0 %v920
    %927 = vmatprep.subr.mxu0 0.0
    %928 = vmatpush1.msra.mxu0 0.0
    %929 = vmatprep.subr.mxu0 0.0
    %930 = vmatpush1.msra.mxu0 0.0
    %931 = vmatprep.subr.mxu0 0.0
    %932 = vmatpush1.msra.mxu0 0.0
    %933 = vmatprep.subr.mxu0 0.0
    %934 = vmatpush1.msra.mxu0 0.0
    %935 = vmatprep.subr.mxu0 0.0
    %936 = vmatpush1.msra.mxu0 0.0
    %937 = vmatprep.subr.mxu0 0.0
    %938 = vmatpush1.msra.mxu0 0.0
    %939 = vmatprep.subr.mxu0 0.0
    %940 = vmatpush1.msra.mxu0 0.0
    %941 = vmatprep.subr.mxu0 0.0
    %942 = vmatpush1.msra.mxu0 0.0
    %943 = vmatprep.subr.mxu0 0.0
    %944 = vmatpush1.msra.mxu0 0.0
    %945 = vmatprep.subr.mxu0 0.0
    %946 = vmatpush1.msra.mxu0 0.0
    %947 = vmatprep.subr.mxu0 0.0
    %948 = vmatpush1.msra.mxu0 0.0
    %949 = vmatprep.subr.mxu0 0.0
    %950 = vmatpush1.msra.mxu0 0.0
    %951 = vmatprep.subr.mxu0 0.0
    %952 = vmatpush1.msra.mxu0 0.0
    %953 = vmatprep.subr.mxu0 0.0
    %954 = vmatpush1.msra.mxu0 0.0
    %955 = vmatprep.subr.mxu0 0.0
    %956 = vmatpush1.msra.mxu0 0.0
    %957 = vmatprep.subr.mxu0 0.0
    %958 = vmatpush1.msra.mxu0 0.0
    %959 = vmatprep.subr.mxu0 0.0
    %960 = vmatpush1.msra.mxu0 0.0
    %961 = vmatprep.subr.mxu0 0.0
    %962 = vmatpush1.msra.mxu0 0.0
    %963 = vmatprep.subr.mxu0 0.0
    %964 = vmatpush1.msra.mxu0 0.0
    %965 = vmatprep.subr.mxu0 0.0
    %966 = vmatpush1.msra.mxu0 0.0
    %967 = vmatprep.subr.mxu0 0.0
    %968 = vmatpush1.msra.mxu0 0.0
    %969 = vmatprep.subr.mxu0 0.0
    %970 = vmatpush1.msra.mxu0 0.0
    %971 = vmatprep.subr.mxu0 0.0
    %972 = vmatpush1.msra.mxu0 0.0
    %973 = vmatprep.subr.mxu0 0.0
    %974 = vmatpush1.msra.mxu0 0.0
    %975 = vmatprep.subr.mxu0 0.0
    %976 = vmatpush1.msra.mxu0 0.0
    %977 = vmatprep.subr.mxu0 0.0
    %978 = vmatpush1.msra.mxu0 0.0
    %979 = vmatprep.subr.mxu0 0.0
    %980 = vmatpush1.msra.mxu0 0.0
    %981 = vmatprep.subr.mxu0 0.0
    %982 = vmatpush1.msra.mxu0 0.0
    %983 = vmatprep.subr.mxu0 0.0
    %984 = vmatpush1.msra.mxu0 0.0
    %985 = vmatprep.subr.mxu0 0.0
    %986 = vmatpush1.msra.mxu0 0.0
    %987 = vmatprep.subr.mxu0 0.0
    %988 = vmatpush1.msra.mxu0 0.0
    %989 = vmatprep.mubr.f32.mxu0 0.0
    %990 = vmatmul.mubr.f32.gmra.mrb[0].mxu0 %v923
    %v991 = vpop.f32.mrb[0].mxu0
    %v992 = vadd.f32 0.0, %v991
    %v993 = vpop.f32.mrb[0].mxu0
    %994 = vdwg.mxu0
    %995 = vrot.lane.b32.xlu0 %v182, 112
    %v996 = vpop.permute.xlu0 %995
    %v999 = vsel %vm201, %v912, 0
    %1001 = vmatprep.subr.mxu0 0.0
    %1002 = vmatpush1.msra.mxu0 %v996
    %1003 = vmatprep.subr.mxu0 0.0
    %1004 = vmatpush1.msra.mxu0 0.0
    %1005 = vmatprep.subr.mxu0 0.0
    %1006 = vmatpush1.msra.mxu0 0.0
    %1007 = vmatprep.subr.mxu0 0.0
    %1008 = vmatpush1.msra.mxu0 0.0
    %1009 = vmatprep.subr.mxu0 0.0
    %1010 = vmatpush1.msra.mxu0 0.0
    %1011 = vmatprep.subr.mxu0 0.0
    %1012 = vmatpush1.msra.mxu0 0.0
    %1013 = vmatprep.subr.mxu0 0.0
    %1014 = vmatpush1.msra.mxu0 0.0
    %1015 = vmatprep.subr.mxu0 0.0
    %1016 = vmatpush1.msra.mxu0 0.0
    %1017 = vmatprep.subr.mxu0 0.0
    %1018 = vmatpush1.msra.mxu0 0.0
    %1019 = vmatprep.subr.mxu0 0.0
    %1020 = vmatpush1.msra.mxu0 0.0
    %1021 = vmatprep.subr.mxu0 0.0
    %1022 = vmatpush1.msra.mxu0 0.0
    %1023 = vmatprep.subr.mxu0 0.0
    %1024 = vmatpush1.msra.mxu0 0.0
    %1025 = vmatprep.subr.mxu0 0.0
    %1026 = vmatpush1.msra.mxu0 0.0
    %1027 = vmatprep.subr.mxu0 0.0
    %1028 = vmatpush1.msra.mxu0 0.0
    %1029 = vmatprep.subr.mxu0 0.0
    %1030 = vmatpush1.msra.mxu0 0.0
    %1031 = vmatprep.subr.mxu0 0.0
    %1032 = vmatpush1.msra.mxu0 0.0
    %1033 = vmatprep.subr.mxu0 0.0
    %1034 = vmatpush1.msra.mxu0 0.0
    %1035 = vmatprep.subr.mxu0 0.0
    %1036 = vmatpush1.msra.mxu0 0.0
    %1037 = vmatprep.subr.mxu0 0.0
    %1038 = vmatpush1.msra.mxu0 0.0
    %1039 = vmatprep.subr.mxu0 0.0
    %1040 = vmatpush1.msra.mxu0 0.0
    %1041 = vmatprep.subr.mxu0 0.0
    %1042 = vmatpush1.msra.mxu0 0.0
    %1043 = vmatprep.subr.mxu0 0.0
    %1044 = vmatpush1.msra.mxu0 0.0
    %1045 = vmatprep.subr.mxu0 0.0
    %1046 = vmatpush1.msra.mxu0 0.0
    %1047 = vmatprep.subr.mxu0 0.0
    %1048 = vmatpush1.msra.mxu0 0.0
    %1049 = vmatprep.subr.mxu0 0.0
    %1050 = vmatpush1.msra.mxu0 0.0
    %1051 = vmatprep.subr.mxu0 0.0
    %1052 = vmatpush1.msra.mxu0 0.0
    %1053 = vmatprep.subr.mxu0 0.0
    %1054 = vmatpush1.msra.mxu0 0.0
    %1055 = vmatprep.subr.mxu0 0.0
    %1056 = vmatpush1.msra.mxu0 0.0
    %1057 = vmatprep.subr.mxu0 0.0
    %1058 = vmatpush1.msra.mxu0 0.0
    %1059 = vmatprep.subr.mxu0 0.0
    %1060 = vmatpush1.msra.mxu0 0.0
    %1061 = vmatprep.subr.mxu0 0.0
    %1062 = vmatpush1.msra.mxu0 0.0
    %1063 = vmatprep.subr.mxu0 0.0
    %1064 = vmatpush1.msra.mxu0 0.0
    %1065 = vmatprep.mubr.f32.mxu0 0.0
    %1066 = vmatmul.mubr.f32.gmra.mrb[0].mxu0 %v999
    %v1067 = vpop.f32.mrb[0].mxu0
    %v1068 = vadd.f32 0.0, %v1067
    %v1069 = vpop.f32.mrb[0].mxu0
    %1070 = vdwg.mxu0
    %1071 = vrot.lane.b32.xlu0 %v188, 112
    %v1072 = vpop.permute.xlu0 %1071
    %v1075 = vsel %vm201, %v913, 0
    %1077 = vmatprep.subr.mxu0 0.0
    %1078 = vmatpush1.msra.mxu0 %v1072
    %1079 = vmatprep.subr.mxu0 0.0
    %1080 = vmatpush1.msra.mxu0 0.0
    %1081 = vmatprep.subr.mxu0 0.0
    %1082 = vmatpush1.msra.mxu0 0.0
    %1083 = vmatprep.subr.mxu0 0.0
    %1084 = vmatpush1.msra.mxu0 0.0
    %1085 = vmatprep.subr.mxu0 0.0
    %1086 = vmatpush1.msra.mxu0 0.0
    %1087 = vmatprep.subr.mxu0 0.0
    %1088 = vmatpush1.msra.mxu0 0.0
    %1089 = vmatprep.subr.mxu0 0.0
    %1090 = vmatpush1.msra.mxu0 0.0
    %1091 = vmatprep.subr.mxu0 0.0
    %1092 = vmatpush1.msra.mxu0 0.0
    %1093 = vmatprep.subr.mxu0 0.0
    %1094 = vmatpush1.msra.mxu0 0.0
    %1095 = vmatprep.subr.mxu0 0.0
    %1096 = vmatpush1.msra.mxu0 0.0
    %1097 = vmatprep.subr.mxu0 0.0
    %1098 = vmatpush1.msra.mxu0 0.0
    %1099 = vmatprep.subr.mxu0 0.0
    %1100 = vmatpush1.msra.mxu0 0.0
    %1101 = vmatprep.subr.mxu0 0.0
    %1102 = vmatpush1.msra.mxu0 0.0
    %1103 = vmatprep.subr.mxu0 0.0
    %1104 = vmatpush1.msra.mxu0 0.0
    %1105 = vmatprep.subr.mxu0 0.0
    %1106 = vmatpush1.msra.mxu0 0.0
    %1107 = vmatprep.subr.mxu0 0.0
    %1108 = vmatpush1.msra.mxu0 0.0
    %1109 = vmatprep.subr.mxu0 0.0
    %1110 = vmatpush1.msra.mxu0 0.0
    %1111 = vmatprep.subr.mxu0 0.0
    %1112 = vmatpush1.msra.mxu0 0.0
    %1113 = vmatprep.subr.mxu0 0.0
    %1114 = vmatpush1.msra.mxu0 0.0
    %1115 = vmatprep.subr.mxu0 0.0
    %1116 = vmatpush1.msra.mxu0 0.0
    %1117 = vmatprep.subr.mxu0 0.0
    %1118 = vmatpush1.msra.mxu0 0.0
    %1119 = vmatprep.subr.mxu0 0.0
    %1120 = vmatpush1.msra.mxu0 0.0
    %1121 = vmatprep.subr.mxu0 0.0
    %1122 = vmatpush1.msra.mxu0 0.0
    %1123 = vmatprep.subr.mxu0 0.0
    %1124 = vmatpush1.msra.mxu0 0.0
    %1125 = vmatprep.subr.mxu0 0.0
    %1126 = vmatpush1.msra.mxu0 0.0
    %1127 = vmatprep.subr.mxu0 0.0
    %1128 = vmatpush1.msra.mxu0 0.0
    %1129 = vmatprep.subr.mxu0 0.0
    %1130 = vmatpush1.msra.mxu0 0.0
    %1131 = vmatprep.subr.mxu0 0.0
    %1132 = vmatpush1.msra.mxu0 0.0
    %1133 = vmatprep.subr.mxu0 0.0
    %1134 = vmatpush1.msra.mxu0 0.0
    %1135 = vmatprep.subr.mxu0 0.0
    %1136 = vmatpush1.msra.mxu0 0.0
    %1137 = vmatprep.subr.mxu0 0.0
    %1138 = vmatpush1.msra.mxu0 0.0
    %1139 = vmatprep.subr.mxu0 0.0
    %1140 = vmatpush1.msra.mxu0 0.0
    %1141 = vmatprep.mubr.f32.mxu0 0.0
    %1142 = vmatmul.mubr.f32.gmra.mrb[0].mxu0 %v1075
    %v1143 = vpop.f32.mrb[0].mxu0
    %v1144 = vadd.f32 0.0, %v1143
    %v1145 = vpop.f32.mrb[0].mxu0
    %1146 = vdwg.mxu0
    %1147 = vrot.lane.b32.xlu0 %v190, 112
    %v1148 = vpop.permute.xlu0 %1147
    %v1151 = vsel %vm201, %v914, 0
    %1153 = vmatprep.subr.mxu0 0.0
    %1154 = vmatpush1.msra.mxu0 %v1148
    %1155 = vmatprep.subr.mxu0 0.0
    %1156 = vmatpush1.msra.mxu0 0.0
    %1157 = vmatprep.subr.mxu0 0.0
    %1158 = vmatpush1.msra.mxu0 0.0
    %1159 = vmatprep.subr.mxu0 0.0
    %1160 = vmatpush1.msra.mxu0 0.0
    %1161 = vmatprep.subr.mxu0 0.0
    %1162 = vmatpush1.msra.mxu0 0.0
    %1163 = vmatprep.subr.mxu0 0.0
    %1164 = vmatpush1.msra.mxu0 0.0
    %1165 = vmatprep.subr.mxu0 0.0
    %1166 = vmatpush1.msra.mxu0 0.0
    %1167 = vmatprep.subr.mxu0 0.0
    %1168 = vmatpush1.msra.mxu0 0.0
    %1169 = vmatprep.subr.mxu0 0.0
    %1170 = vmatpush1.msra.mxu0 0.0
    %1171 = vmatprep.subr.mxu0 0.0
    %1172 = vmatpush1.msra.mxu0 0.0
    %1173 = vmatprep.subr.mxu0 0.0
    %1174 = vmatpush1.msra.mxu0 0.0
    %1175 = vmatprep.subr.mxu0 0.0
    %1176 = vmatpush1.msra.mxu0 0.0
    %1177 = vmatprep.subr.mxu0 0.0
    %1178 = vmatpush1.msra.mxu0 0.0
    %1179 = vmatprep.subr.mxu0 0.0
    %1180 = vmatpush1.msra.mxu0 0.0
    %1181 = vmatprep.subr.mxu0 0.0
    %1182 = vmatpush1.msra.mxu0 0.0
    %1183 = vmatprep.subr.mxu0 0.0
    %1184 = vmatpush1.msra.mxu0 0.0
    %1185 = vmatprep.subr.mxu0 0.0
    %1186 = vmatpush1.msra.mxu0 0.0
    %1187 = vmatprep.subr.mxu0 0.0
    %1188 = vmatpush1.msra.mxu0 0.0
    %1189 = vmatprep.subr.mxu0 0.0
    %1190 = vmatpush1.msra.mxu0 0.0
    %1191 = vmatprep.subr.mxu0 0.0
    %1192 = vmatpush1.msra.mxu0 0.0
    %1193 = vmatprep.subr.mxu0 0.0
    %1194 = vmatpush1.msra.mxu0 0.0
    %1195 = vmatprep.subr.mxu0 0.0
    %1196 = vmatpush1.msra.mxu0 0.0
    %1197 = vmatprep.subr.mxu0 0.0
    %1198 = vmatpush1.msra.mxu0 0.0
    %1199 = vmatprep.subr.mxu0 0.0
    %1200 = vmatpush1.msra.mxu0 0.0
    %1201 = vmatprep.subr.mxu0 0.0
    %1202 = vmatpush1.msra.mxu0 0.0
    %1203 = vmatprep.subr.mxu0 0.0
    %1204 = vmatpush1.msra.mxu0 0.0
    %1205 = vmatprep.subr.mxu0 0.0
    %1206 = vmatpush1.msra.mxu0 0.0
    %1207 = vmatprep.subr.mxu0 0.0
    %1208 = vmatpush1.msra.mxu0 0.0
    %1209 = vmatprep.subr.mxu0 0.0
    %1210 = vmatpush1.msra.mxu0 0.0
    %1211 = vmatprep.subr.mxu0 0.0
    %1212 = vmatpush1.msra.mxu0 0.0
    %1213 = vmatprep.subr.mxu0 0.0
    %1214 = vmatpush1.msra.mxu0 0.0
    %1215 = vmatprep.subr.mxu0 0.0
    %1216 = vmatpush1.msra.mxu0 0.0
    %1217 = vmatprep.mubr.f32.mxu0 0.0
    %1218 = vmatmul.mubr.f32.gmra.mrb[0].mxu0 %v1151
    %v1219 = vpop.f32.mrb[0].mxu0
    %v1220 = vadd.f32 0.0, %v1219
    %v1221 = vpop.f32.mrb[0].mxu0
    %1222 = vdwg.mxu0
    %1223 = vrot.lane.b32.xlu0 %v192, 112
    %v1224 = vpop.permute.xlu0 %1223
    %v1227 = vsel %vm201, %v915, 0
    %1229 = vmatprep.subr.mxu0 0.0
    %1230 = vmatpush1.msra.mxu0 %v1224
    %1231 = vmatprep.subr.mxu0 0.0
    %1232 = vmatpush1.msra.mxu0 0.0
    %1233 = vmatprep.subr.mxu0 0.0
    %1234 = vmatpush1.msra.mxu0 0.0
    %1235 = vmatprep.subr.mxu0 0.0
    %1236 = vmatpush1.msra.mxu0 0.0
    %1237 = vmatprep.subr.mxu0 0.0
    %1238 = vmatpush1.msra.mxu0 0.0
    %1239 = vmatprep.subr.mxu0 0.0
    %1240 = vmatpush1.msra.mxu0 0.0
    %1241 = vmatprep.subr.mxu0 0.0
    %1242 = vmatpush1.msra.mxu0 0.0
    %1243 = vmatprep.subr.mxu0 0.0
    %1244 = vmatpush1.msra.mxu0 0.0
    %1245 = vmatprep.subr.mxu0 0.0
    %1246 = vmatpush1.msra.mxu0 0.0
    %1247 = vmatprep.subr.mxu0 0.0
    %1248 = vmatpush1.msra.mxu0 0.0
    %1249 = vmatprep.subr.mxu0 0.0
    %1250 = vmatpush1.msra.mxu0 0.0
    %1251 = vmatprep.subr.mxu0 0.0
    %1252 = vmatpush1.msra.mxu0 0.0
    %1253 = vmatprep.subr.mxu0 0.0
    %1254 = vmatpush1.msra.mxu0 0.0
    %1255 = vmatprep.subr.mxu0 0.0
    %1256 = vmatpush1.msra.mxu0 0.0
    %1257 = vmatprep.subr.mxu0 0.0
    %1258 = vmatpush1.msra.mxu0 0.0
    %1259 = vmatprep.subr.mxu0 0.0
    %1260 = vmatpush1.msra.mxu0 0.0
    %1261 = vmatprep.subr.mxu0 0.0
    %1262 = vmatpush1.msra.mxu0 0.0
    %1263 = vmatprep.subr.mxu0 0.0
    %1264 = vmatpush1.msra.mxu0 0.0
    %1265 = vmatprep.subr.mxu0 0.0
    %1266 = vmatpush1.msra.mxu0 0.0
    %1267 = vmatprep.subr.mxu0 0.0
    %1268 = vmatpush1.msra.mxu0 0.0
    %1269 = vmatprep.subr.mxu0 0.0
    %1270 = vmatpush1.msra.mxu0 0.0
    %1271 = vmatprep.subr.mxu0 0.0
    %1272 = vmatpush1.msra.mxu0 0.0
    %1273 = vmatprep.subr.mxu0 0.0
    %1274 = vmatpush1.msra.mxu0 0.0
    %1275 = vmatprep.subr.mxu0 0.0
    %1276 = vmatpush1.msra.mxu0 0.0
    %1277 = vmatprep.subr.mxu0 0.0
    %1278 = vmatpush1.msra.mxu0 0.0
    %1279 = vmatprep.subr.mxu0 0.0
    %1280 = vmatpush1.msra.mxu0 0.0
    %1281 = vmatprep.subr.mxu0 0.0
    %1282 = vmatpush1.msra.mxu0 0.0
    %1283 = vmatprep.subr.mxu0 0.0
    %1284 = vmatpush1.msra.mxu0 0.0
    %1285 = vmatprep.subr.mxu0 0.0
    %1286 = vmatpush1.msra.mxu0 0.0
    %1287 = vmatprep.subr.mxu0 0.0
    %1288 = vmatpush1.msra.mxu0 0.0
    %1289 = vmatprep.subr.mxu0 0.0
    %1290 = vmatpush1.msra.mxu0 0.0
    %1291 = vmatprep.subr.mxu0 0.0
    %1292 = vmatpush1.msra.mxu0 0.0
    %1293 = vmatprep.mubr.f32.mxu0 0.0
    %1294 = vmatmul.mubr.f32.gmra.mrb[0].mxu0 %v1227
    %v1295 = vpop.f32.mrb[0].mxu0
    %v1296 = vadd.f32 0.0, %v1295
    %v1297 = vpop.f32.mrb[0].mxu0
    %1298 = vdwg.mxu0
    %1299 = vrot.lane.b32.xlu0 %v194, 112
    %v1300 = vpop.permute.xlu0 %1299
    %v1303 = vsel %vm201, %v916, 0
    %1305 = vmatprep.subr.mxu0 0.0
    %1306 = vmatpush1.msra.mxu0 %v1300
    %1307 = vmatprep.subr.mxu0 0.0
    %1308 = vmatpush1.msra.mxu0 0.0
    %1309 = vmatprep.subr.mxu0 0.0
    %1310 = vmatpush1.msra.mxu0 0.0
    %1311 = vmatprep.subr.mxu0 0.0
    %1312 = vmatpush1.msra.mxu0 0.0
    %1313 = vmatprep.subr.mxu0 0.0
    %1314 = vmatpush1.msra.mxu0 0.0
    %1315 = vmatprep.subr.mxu0 0.0
    %1316 = vmatpush1.msra.mxu0 0.0
    %1317 = vmatprep.subr.mxu0 0.0
    %1318 = vmatpush1.msra.mxu0 0.0
    %1319 = vmatprep.subr.mxu0 0.0
    %1320 = vmatpush1.msra.mxu0 0.0
    %1321 = vmatprep.subr.mxu0 0.0
    %1322 = vmatpush1.msra.mxu0 0.0
    %1323 = vmatprep.subr.mxu0 0.0
    %1324 = vmatpush1.msra.mxu0 0.0
    %1325 = vmatprep.subr.mxu0 0.0
    %1326 = vmatpush1.msra.mxu0 0.0
    %1327 = vmatprep.subr.mxu0 0.0
    %1328 = vmatpush1.msra.mxu0 0.0
    %1329 = vmatprep.subr.mxu0 0.0
    %1330 = vmatpush1.msra.mxu0 0.0
    %1331 = vmatprep.subr.mxu0 0.0
    %1332 = vmatpush1.msra.mxu0 0.0
    %1333 = vmatprep.subr.mxu0 0.0
    %1334 = vmatpush1.msra.mxu0 0.0
    %1335 = vmatprep.subr.mxu0 0.0
    %1336 = vmatpush1.msra.mxu0 0.0
    %1337 = vmatprep.subr.mxu0 0.0
    %1338 = vmatpush1.msra.mxu0 0.0
    %1339 = vmatprep.subr.mxu0 0.0
    %1340 = vmatpush1.msra.mxu0 0.0
    %1341 = vmatprep.subr.mxu0 0.0
    %1342 = vmatpush1.msra.mxu0 0.0
    %1343 = vmatprep.subr.mxu0 0.0
    %1344 = vmatpush1.msra.mxu0 0.0
    %1345 = vmatprep.subr.mxu0 0.0
    %1346 = vmatpush1.msra.mxu0 0.0
    %1347 = vmatprep.subr.mxu0 0.0
    %1348 = vmatpush1.msra.mxu0 0.0
    %1349 = vmatprep.subr.mxu0 0.0
    %1350 = vmatpush1.msra.mxu0 0.0
    %1351 = vmatprep.subr.mxu0 0.0
    %1352 = vmatpush1.msra.mxu0 0.0
    %1353 = vmatprep.subr.mxu0 0.0
    %1354 = vmatpush1.msra.mxu0 0.0
    %1355 = vmatprep.subr.mxu0 0.0
    %1356 = vmatpush1.msra.mxu0 0.0
    %1357 = vmatprep.subr.mxu0 0.0
    %1358 = vmatpush1.msra.mxu0 0.0
    %1359 = vmatprep.subr.mxu0 0.0
    %1360 = vmatpush1.msra.mxu0 0.0
    %1361 = vmatprep.subr.mxu0 0.0
    %1362 = vmatpush1.msra.mxu0 0.0
    %1363 = vmatprep.subr.mxu0 0.0
    %1364 = vmatpush1.msra.mxu0 0.0
    %1365 = vmatprep.subr.mxu0 0.0
    %1366 = vmatpush1.msra.mxu0 0.0
    %1367 = vmatprep.subr.mxu0 0.0
    %1368 = vmatpush1.msra.mxu0 0.0
    %1369 = vmatprep.mubr.f32.mxu0 0.0
    %1370 = vmatmul.mubr.f32.gmra.mrb[0].mxu0 %v1303
    %v1371 = vpop.f32.mrb[0].mxu0
    %v1372 = vadd.f32 0.0, %v1371
    %v1373 = vpop.f32.mrb[0].mxu0
    %1374 = vdwg.mxu0
    %1375 = vrot.lane.b32.xlu0 %v196, 112
    %v1376 = vpop.permute.xlu0 %1375
    %v1379 = vsel %vm201, %v917, 0
    %1381 = vmatprep.subr.mxu0 0.0
    %1382 = vmatpush1.msra.mxu0 %v1376
    %1383 = vmatprep.subr.mxu0 0.0
    %1384 = vmatpush1.msra.mxu0 0.0
    %1385 = vmatprep.subr.mxu0 0.0
    %1386 = vmatpush1.msra.mxu0 0.0
    %1387 = vmatprep.subr.mxu0 0.0
    %1388 = vmatpush1.msra.mxu0 0.0
    %1389 = vmatprep.subr.mxu0 0.0
    %1390 = vmatpush1.msra.mxu0 0.0
    %1391 = vmatprep.subr.mxu0 0.0
    %1392 = vmatpush1.msra.mxu0 0.0
    %1393 = vmatprep.subr.mxu0 0.0
    %1394 = vmatpush1.msra.mxu0 0.0
    %1395 = vmatprep.subr.mxu0 0.0
    %1396 = vmatpush1.msra.mxu0 0.0
    %1397 = vmatprep.subr.mxu0 0.0
    %1398 = vmatpush1.msra.mxu0 0.0
    %1399 = vmatprep.subr.mxu0 0.0
    %1400 = vmatpush1.msra.mxu0 0.0
    %1401 = vmatprep.subr.mxu0 0.0
    %1402 = vmatpush1.msra.mxu0 0.0
    %1403 = vmatprep.subr.mxu0 0.0
    %1404 = vmatpush1.msra.mxu0 0.0
    %1405 = vmatprep.subr.mxu0 0.0
    %1406 = vmatpush1.msra.mxu0 0.0
    %1407 = vmatprep.subr.mxu0 0.0
    %1408 = vmatpush1.msra.mxu0 0.0
    %1409 = vmatprep.subr.mxu0 0.0
    %1410 = vmatpush1.msra.mxu0 0.0
    %1411 = vmatprep.subr.mxu0 0.0
    %1412 = vmatpush1.msra.mxu0 0.0
    %1413 = vmatprep.subr.mxu0 0.0
    %1414 = vmatpush1.msra.mxu0 0.0
    %1415 = vmatprep.subr.mxu0 0.0
    %1416 = vmatpush1.msra.mxu0 0.0
    %1417 = vmatprep.subr.mxu0 0.0
    %1418 = vmatpush1.msra.mxu0 0.0
    %1419 = vmatprep.subr.mxu0 0.0
    %1420 = vmatpush1.msra.mxu0 0.0
    %1421 = vmatprep.subr.mxu0 0.0
    %1422 = vmatpush1.msra.mxu0 0.0
    %1423 = vmatprep.subr.mxu0 0.0
    %1424 = vmatpush1.msra.mxu0 0.0
    %1425 = vmatprep.subr.mxu0 0.0
    %1426 = vmatpush1.msra.mxu0 0.0
    %1427 = vmatprep.subr.mxu0 0.0
    %1428 = vmatpush1.msra.mxu0 0.0
    %1429 = vmatprep.subr.mxu0 0.0
    %1430 = vmatpush1.msra.mxu0 0.0
    %1431 = vmatprep.subr.mxu0 0.0
    %1432 = vmatpush1.msra.mxu0 0.0
    %1433 = vmatprep.subr.mxu0 0.0
    %1434 = vmatpush1.msra.mxu0 0.0
    %1435 = vmatprep.subr.mxu0 0.0
    %1436 = vmatpush1.msra.mxu0 0.0
    %1437 = vmatprep.subr.mxu0 0.0
    %1438 = vmatpush1.msra.mxu0 0.0
    %1439 = vmatprep.subr.mxu0 0.0
    %1440 = vmatpush1.msra.mxu0 0.0
    %1441 = vmatprep.subr.mxu0 0.0
    %1442 = vmatpush1.msra.mxu0 0.0
    %1443 = vmatprep.subr.mxu0 0.0
    %1444 = vmatpush1.msra.mxu0 0.0
    %1445 = vmatprep.mubr.f32.mxu0 0.0
    %1446 = vmatmul.mubr.f32.gmra.mrb[0].mxu0 %v1379
    %v1447 = vpop.f32.mrb[0].mxu0
    %v1448 = vadd.f32 0.0, %v1447
    %v1449 = vpop.f32.mrb[0].mxu0
    %1450 = vdwg.mxu0
    %1451 = vrot.lane.b32.xlu0 %v198, 112
    %v1452 = vpop.permute.xlu0 %1451
    %v1455 = vsel %vm201, %v918, 0
    %1457 = vmatprep.subr.mxu0 0.0
    %1458 = vmatpush1.msra.mxu0 %v1452
    %1459 = vmatprep.subr.mxu0 0.0
    %1460 = vmatpush1.msra.mxu0 0.0
    %1461 = vmatprep.subr.mxu0 0.0
    %1462 = vmatpush1.msra.mxu0 0.0
    %1463 = vmatprep.subr.mxu0 0.0
    %1464 = vmatpush1.msra.mxu0 0.0
    %1465 = vmatprep.subr.mxu0 0.0
    %1466 = vmatpush1.msra.mxu0 0.0
    %1467 = vmatprep.subr.mxu0 0.0
    %1468 = vmatpush1.msra.mxu0 0.0
    %1469 = vmatprep.subr.mxu0 0.0
    %1470 = vmatpush1.msra.mxu0 0.0
    %1471 = vmatprep.subr.mxu0 0.0
    %1472 = vmatpush1.msra.mxu0 0.0
    %1473 = vmatprep.subr.mxu0 0.0
    %1474 = vmatpush1.msra.mxu0 0.0
    %1475 = vmatprep.subr.mxu0 0.0
    %1476 = vmatpush1.msra.mxu0 0.0
    %1477 = vmatprep.subr.mxu0 0.0
    %1478 = vmatpush1.msra.mxu0 0.0
    %1479 = vmatprep.subr.mxu0 0.0
    %1480 = vmatpush1.msra.mxu0 0.0
    %1481 = vmatprep.subr.mxu0 0.0
    %1482 = vmatpush1.msra.mxu0 0.0
    %1483 = vmatprep.subr.mxu0 0.0
    %1484 = vmatpush1.msra.mxu0 0.0
    %1485 = vmatprep.subr.mxu0 0.0
    %1486 = vmatpush1.msra.mxu0 0.0
    %1487 = vmatprep.subr.mxu0 0.0
    %1488 = vmatpush1.msra.mxu0 0.0
    %1489 = vmatprep.subr.mxu0 0.0
    %1490 = vmatpush1.msra.mxu0 0.0
    %1491 = vmatprep.subr.mxu0 0.0
    %1492 = vmatpush1.msra.mxu0 0.0
    %1493 = vmatprep.subr.mxu0 0.0
    %1494 = vmatpush1.msra.mxu0 0.0
    %1495 = vmatprep.subr.mxu0 0.0
    %1496 = vmatpush1.msra.mxu0 0.0
    %1497 = vmatprep.subr.mxu0 0.0
    %1498 = vmatpush1.msra.mxu0 0.0
    %1499 = vmatprep.subr.mxu0 0.0
    %1500 = vmatpush1.msra.mxu0 0.0
    %1501 = vmatprep.subr.mxu0 0.0
    %1502 = vmatpush1.msra.mxu0 0.0
    %1503 = vmatprep.subr.mxu0 0.0
    %1504 = vmatpush1.msra.mxu0 0.0
    %1505 = vmatprep.subr.mxu0 0.0
    %1506 = vmatpush1.msra.mxu0 0.0
    %1507 = vmatprep.subr.mxu0 0.0
    %1508 = vmatpush1.msra.mxu0 0.0
    %1509 = vmatprep.subr.mxu0 0.0
    %1510 = vmatpush1.msra.mxu0 0.0
    %1511 = vmatprep.subr.mxu0 0.0
    %1512 = vmatpush1.msra.mxu0 0.0
    %1513 = vmatprep.subr.mxu0 0.0
    %1514 = vmatpush1.msra.mxu0 0.0
    %1515 = vmatprep.subr.mxu0 0.0
    %1516 = vmatpush1.msra.mxu0 0.0
    %1517 = vmatprep.subr.mxu0 0.0
    %1518 = vmatpush1.msra.mxu0 0.0
    %1519 = vmatprep.subr.mxu0 0.0
    %1520 = vmatpush1.msra.mxu0 0.0
    %1521 = vmatprep.mubr.f32.mxu0 0.0
    %1522 = vmatmul.mubr.f32.gmra.mrb[0].mxu0 %v1455
    %v1523 = vpop.f32.mrb[0].mxu0
    %v1524 = vadd.f32 0.0, %v1523
    %v1525 = vpop.f32.mrb[0].mxu0
    %1526 = vdwg.mxu0
    %1529 = vrot.lane.b32.xlu0 %v1144, 8
    %v1530 = vpop.permute.xlu0 %1529
    %1531 = vrot.lane.b32.xlu0 %v1220, 8
    %v1532 = vpop.permute.xlu0 %1531
    %1537 = vrot.lane.b32.xlu0 %v1296, 16
    %v1538 = vpop.permute.xlu0 %1537
    %1539 = vrot.lane.b32.xlu0 %v1372, 16
    %v1540 = vpop.permute.xlu0 %1539
    %1545 = vrot.lane.b32.xlu0 %v1448, 24
    %v1546 = vpop.permute.xlu0 %1545
    %1547 = vrot.lane.b32.xlu0 %v1524, 24
    %v1548 = vpop.permute.xlu0 %1547
    %v1551 = vsel %vm201, %v992, %v1530
    %v1552 = vsel %vm201, %v1068, %v1532
    %vm1553 = vcmask 130048
    %v1554 = vsel %vm1553, %v1551, %v1538
    %v1555 = vsel %vm1553, %v1552, %v1540
    %vm1556 = vcmask 195584
    %v1557 = vsel %vm1556, %v1554, %v1546
    %v1558 = vsel %vm1556, %v1555, %v1548
    %v1559 = vld [vmem:[%s5] sm:$0xff]
    %v1560 = vld [vmem:[%s5 + $0x8] sm:$0xff]
    %v1561 = vld [vmem:[%s5 + $0x10] sm:$0xff]
    %v1562 = vld [vmem:[%s5 + $0x18] sm:$0xff]
    %v1563 = vld [vmem:[%s6] sm:$0x1]
    %v1565 = vlaneseq
    %v1566 = vshrl.u32 %v1565, 7
    %v1567 = vsub.s32 0, %v1566
    %v1568 = vrot.slane %v1563, %v1567
    %v1571 = vsel %vm49, %v1557, 0
    %v1574 = vsel %vm49, %v1558, 0
    %1576 = vmatprep.subr.mxu0 0.0
    %1577 = vmatpush1.msra.mxu0 %v1559
    %1578 = vmatprep.subr.mxu0 0.0
    %1579 = vmatpush1.msra.mxu0 %v1560
    %1580 = vmatprep.subr.mxu0 0.0
    %1581 = vmatpush1.msra.mxu0 %v1561
    %1582 = vmatprep.subr.mxu0 0.0
    %1583 = vmatpush1.msra.mxu0 %v1562
    %1584 = vmatprep.subr.mxu0 0.0
    %1585 = vmatpush1.msra.mxu0 0.0
    %1586 = vmatprep.subr.mxu0 0.0
    %1587 = vmatpush1.msra.mxu0 0.0
    %1588 = vmatprep.subr.mxu0 0.0
    %1589 = vmatpush1.msra.mxu0 0.0
    %1590 = vmatprep.subr.mxu0 0.0
    %1591 = vmatpush1.msra.mxu0 0.0
    %1592 = vmatprep.subr.mxu0 0.0
    %1593 = vmatpush1.msra.mxu0 0.0
    %1594 = vmatprep.subr.mxu0 0.0
    %1595 = vmatpush1.msra.mxu0 0.0
    %1596 = vmatprep.subr.mxu0 0.0
    %1597 = vmatpush1.msra.mxu0 0.0
    %1598 = vmatprep.subr.mxu0 0.0
    %1599 = vmatpush1.msra.mxu0 0.0
    %1600 = vmatprep.subr.mxu0 0.0
    %1601 = vmatpush1.msra.mxu0 0.0
    %1602 = vmatprep.subr.mxu0 0.0
    %1603 = vmatpush1.msra.mxu0 0.0
    %1604 = vmatprep.subr.mxu0 0.0
    %1605 = vmatpush1.msra.mxu0 0.0
    %1606 = vmatprep.subr.mxu0 0.0
    %1607 = vmatpush1.msra.mxu0 0.0
    %1608 = vmatprep.subr.mxu0 0.0
    %1609 = vmatpush1.msra.mxu0 0.0
    %1610 = vmatprep.subr.mxu0 0.0
    %1611 = vmatpush1.msra.mxu0 0.0
    %1612 = vmatprep.subr.mxu0 0.0
    %1613 = vmatpush1.msra.mxu0 0.0
    %1614 = vmatprep.subr.mxu0 0.0
    %1615 = vmatpush1.msra.mxu0 0.0
    %1616 = vmatprep.subr.mxu0 0.0
    %1617 = vmatpush1.msra.mxu0 0.0
    %1618 = vmatprep.subr.mxu0 0.0
    %1619 = vmatpush1.msra.mxu0 0.0
    %1620 = vmatprep.subr.mxu0 0.0
    %1621 = vmatpush1.msra.mxu0 0.0
    %1622 = vmatprep.subr.mxu0 0.0
    %1623 = vmatpush1.msra.mxu0 0.0
    %1624 = vmatprep.subr.mxu0 0.0
    %1625 = vmatpush1.msra.mxu0 0.0
    %1626 = vmatprep.subr.mxu0 0.0
    %1627 = vmatpush1.msra.mxu0 0.0
    %1628 = vmatprep.subr.mxu0 0.0
    %1629 = vmatpush1.msra.mxu0 0.0
    %1630 = vmatprep.subr.mxu0 0.0
    %1631 = vmatpush1.msra.mxu0 0.0
    %1632 = vmatprep.subr.mxu0 0.0
    %1633 = vmatpush1.msra.mxu0 0.0
    %1634 = vmatprep.subr.mxu0 0.0
    %1635 = vmatpush1.msra.mxu0 0.0
    %1636 = vmatprep.subr.mxu0 0.0
    %1637 = vmatpush1.msra.mxu0 0.0
    %1638 = vmatprep.subr.mxu0 0.0
    %1639 = vmatpush1.msra.mxu0 0.0
    %1640 = vmatprep.mubr.f32.mxu0 0.0
    %1641 = vmatmul.mubr.f32.gmra.mrb[0].mxu0 %v1571
    %v1642 = vpop.f32.mrb[0].mxu0
    %v1643 = vadd.f32 %v1568, %v1642
    %v1644 = vpop.f32.mrb[0].mxu0
    %1645 = vmatprep.mubr.f32.mxu0 0.0
    %1646 = vmatmul.mubr.f32.gmra.mrb[0].mxu0 %v1574
    %v1647 = vpop.f32.mrb[0].mxu0
    %v1648 = vadd.f32 %v1568, %v1647
    %v1649 = vpop.f32.mrb[0].mxu0
    %1650 = vdwg.mxu0
    %v1651 = vadd.f32 %v1643, %v45
    %v1652 = vadd.f32 %v1648, %v46
    %v1653 = vld [vmem:[%s7] sm:$0x1]
    %v1654 = vld [vmem:[%s8] sm:$0x1]
    %v1655 = vsel %vm49, %v1651, 0.0
    %1656 = vadd.xlane.f32.xlu0 %v1655
    %v1657 = vpop.xlane.xlu0 %1656
    %v1658 = vsel %vm49, %v1652, 0.0
    %1659 = vadd.xlane.f32.xlu0 %v1658
    %v1660 = vpop.xlane.xlu0 %1659
    %v1661 = vmul.f32 %v1657, %v56
    %v1662 = vmul.f32 %v1660, %v56
    %v1663 = vsub.f32 %v1651, %v1661
    %v1664 = vsub.f32 %v1652, %v1662
    %v1665 = vmul.f32 %v1663, %v1663
    %v1666 = vmul.f32 %v1664, %v1664
    %v1667 = vsel %vm49, %v1665, 0.0
    %1668 = vadd.xlane.f32.xlu0 %v1667
    %v1669 = vpop.xlane.xlu0 %1668
    %v1670 = vsel %vm49, %v1666, 0.0
    %1671 = vadd.xlane.f32.xlu0 %v1670
    %v1672 = vpop.xlane.xlu0 %1671
    %v1673 = vmul.f32 %v1669, %v56
    %v1674 = vmul.f32 %v1672, %v56
    %v1675 = vadd.f32 %v1673, 1e-08
    %v1676 = vadd.f32 %v1674, 1e-08
    %v1677 = vrsqrt.pop %v1675
    %v1678 = vrsqrt.pop %v1676
    %v1679 = vmul.f32 %v1663, %v1677
    %v1680 = vmul.f32 %v1664, %v1678
    %v1682 = vlaneseq
    %v1683 = vshrl.u32 %v1682, 7
    %v1684 = vsub.s32 0, %v1683
    %v1685 = vrot.slane %v1653, %v1684
    %v1687 = vmul.f32 %v1685, %v1679
    %v1688 = vmul.f32 %v1685, %v1680
    %v1690 = vlaneseq
    %v1691 = vshrl.u32 %v1690, 7
    %v1692 = vsub.s32 0, %v1691
    %v1693 = vrot.slane %v1654, %v1692
    %v1695 = vadd.f32 %v1687, %v1693
    %v1696 = vadd.f32 %v1688, %v1693
    %v1697 = vld [vmem:[%s9] sm:$0xff]
    %v1698 = vld [vmem:[%s9 + $0x8] sm:$0xff]
    %v1699 = vld [vmem:[%s9 + $0x10] sm:$0xff]
    %v1700 = vld [vmem:[%s9 + $0x18] sm:$0xff]
    %v1701 = vld [vmem:[%s10] sm:$0x1]
    %v1703 = vlaneseq
    %v1704 = vshrl.u32 %v1703, 7
    %v1705 = vsub.s32 0, %v1704
    %v1706 = vrot.slane %v1701, %v1705
    %v1709 = vsel %vm49, %v1695, 0
    %v1712 = vsel %vm49, %v1696, 0
    %1714 = vmatprep.subr.mxu0 0.0
    %1715 = vmatpush1.msra.mxu0 %v1697
    %1716 = vmatprep.subr.mxu0 0.0
    %1717 = vmatpush1.msra.mxu0 %v1698
    %1718 = vmatprep.subr.mxu0 0.0
    %1719 = vmatpush1.msra.mxu0 %v1699
    %1720 = vmatprep.subr.mxu0 0.0
    %1721 = vmatpush1.msra.mxu0 %v1700
    %1722 = vmatprep.subr.mxu0 0.0
    %1723 = vmatpush1.msra.mxu0 0.0
    %1724 = vmatprep.subr.mxu0 0.0
    %1725 = vmatpush1.msra.mxu0 0.0
    %1726 = vmatprep.subr.mxu0 0.0
    %1727 = vmatpush1.msra.mxu0 0.0
    %1728 = vmatprep.subr.mxu0 0.0
    %1729 = vmatpush1.msra.mxu0 0.0
    %1730 = vmatprep.subr.mxu0 0.0
    %1731 = vmatpush1.msra.mxu0 0.0
    %1732 = vmatprep.subr.mxu0 0.0
    %1733 = vmatpush1.msra.mxu0 0.0
    %1734 = vmatprep.subr.mxu0 0.0
    %1735 = vmatpush1.msra.mxu0 0.0
    %1736 = vmatprep.subr.mxu0 0.0
    %1737 = vmatpush1.msra.mxu0 0.0
    %1738 = vmatprep.subr.mxu0 0.0
    %1739 = vmatpush1.msra.mxu0 0.0
    %1740 = vmatprep.subr.mxu0 0.0
    %1741 = vmatpush1.msra.mxu0 0.0
    %1742 = vmatprep.subr.mxu0 0.0
    %1743 = vmatpush1.msra.mxu0 0.0
    %1744 = vmatprep.subr.mxu0 0.0
    %1745 = vmatpush1.msra.mxu0 0.0
    %1746 = vmatprep.subr.mxu0 0.0
    %1747 = vmatpush1.msra.mxu0 0.0
    %1748 = vmatprep.subr.mxu0 0.0
    %1749 = vmatpush1.msra.mxu0 0.0
    %1750 = vmatprep.subr.mxu0 0.0
    %1751 = vmatpush1.msra.mxu0 0.0
    %1752 = vmatprep.subr.mxu0 0.0
    %1753 = vmatpush1.msra.mxu0 0.0
    %1754 = vmatprep.subr.mxu0 0.0
    %1755 = vmatpush1.msra.mxu0 0.0
    %1756 = vmatprep.subr.mxu0 0.0
    %1757 = vmatpush1.msra.mxu0 0.0
    %1758 = vmatprep.subr.mxu0 0.0
    %1759 = vmatpush1.msra.mxu0 0.0
    %1760 = vmatprep.subr.mxu0 0.0
    %1761 = vmatpush1.msra.mxu0 0.0
    %1762 = vmatprep.subr.mxu0 0.0
    %1763 = vmatpush1.msra.mxu0 0.0
    %1764 = vmatprep.subr.mxu0 0.0
    %1765 = vmatpush1.msra.mxu0 0.0
    %1766 = vmatprep.subr.mxu0 0.0
    %1767 = vmatpush1.msra.mxu0 0.0
    %1768 = vmatprep.subr.mxu0 0.0
    %1769 = vmatpush1.msra.mxu0 0.0
    %1770 = vmatprep.subr.mxu0 0.0
    %1771 = vmatpush1.msra.mxu0 0.0
    %1772 = vmatprep.subr.mxu0 0.0
    %1773 = vmatpush1.msra.mxu0 0.0
    %1774 = vmatprep.subr.mxu0 0.0
    %1775 = vmatpush1.msra.mxu0 0.0
    %1776 = vmatprep.subr.mxu0 0.0
    %1777 = vmatpush1.msra.mxu0 0.0
    %1778 = vmatprep.mubr.f32.mxu0 0.0
    %1779 = vmatmul.mubr.f32.gmra.mrb[0].mxu0 %v1709
    %v1780 = vpop.f32.mrb[0].mxu0
    %v1781 = vadd.f32 %v1706, %v1780
    %v1782 = vpop.f32.mrb[0].mxu0
    %1783 = vmatprep.mubr.f32.mxu0 0.0
    %1784 = vmatmul.mubr.f32.gmra.mrb[0].mxu0 %v1712
    %v1785 = vpop.f32.mrb[0].mxu0
    %v1786 = vadd.f32 %v1706, %v1785
    %v1787 = vpop.f32.mrb[0].mxu0
    %1788 = vdwg.mxu0
    %v1789 = vmul.f32 %v1781, 0.5
    %v1790 = vmul.f32 %v1786, 0.5
    %v1791 = vmul.f32 %v1781, 0.044715
    %v1792 = vmul.f32 %v1786, 0.044715
    %v1793 = vmul.f32 %v1791, %v1781
    %v1794 = vmul.f32 %v1792, %v1786
    %v1795 = vmul.f32 %v1793, %v1781
    %v1796 = vmul.f32 %v1794, %v1786
    %v1797 = vadd.f32 %v1781, %v1795
    %v1798 = vadd.f32 %v1786, %v1796
    %v1799 = vmul.f32 %v1797, 0.7978846
    %v1800 = vmul.f32 %v1798, 0.7978846
    %v1801 = vtanh.pop %v1799
    %v1802 = vtanh.pop %v1800
    %v1803 = vadd.f32 %v1801, 1.0
    %v1804 = vadd.f32 %v1802, 1.0
    %v1805 = vmul.f32 %v1789, %v1803
    %v1806 = vmul.f32 %v1790, %v1804
    %v1807 = vld [vmem:[%s11] sm:$0xff]
    %v1808 = vld [vmem:[%s11 + $0x8] sm:$0xff]
    %v1809 = vld [vmem:[%s11 + $0x10] sm:$0xff]
    %v1810 = vld [vmem:[%s11 + $0x18] sm:$0xff]
    %v1811 = vld [vmem:[%s11 + $0x20] sm:$0xff]
    %v1812 = vld [vmem:[%s11 + $0x28] sm:$0xff]
    %v1813 = vld [vmem:[%s11 + $0x30] sm:$0xff]
    %v1814 = vld [vmem:[%s11 + $0x38] sm:$0xff]
    %v1815 = vld [vmem:[%s11 + $0x40] sm:$0xff]
    %v1816 = vld [vmem:[%s11 + $0x48] sm:$0xff]
    %v1817 = vld [vmem:[%s11 + $0x50] sm:$0xff]
    %v1818 = vld [vmem:[%s11 + $0x58] sm:$0xff]
    %v1819 = vld [vmem:[%s11 + $0x60] sm:$0xff]
    %v1820 = vld [vmem:[%s11 + $0x68] sm:$0xff]
    %v1821 = vld [vmem:[%s11 + $0x70] sm:$0xff]
    %v1822 = vld [vmem:[%s11 + $0x78] sm:$0xff]
    %v1823 = vld [vmem:[%s12] sm:$0x1]
    %v1825 = vlaneseq
    %v1826 = vshrl.u32 %v1825, 7
    %v1827 = vsub.s32 0, %v1826
    %v1828 = vrot.slane %v1823, %v1827
    %1830 = vmatprep.subr.mxu0 0.0
    %1831 = vmatpush1.msra.mxu0 %v1807
    %1832 = vmatprep.subr.mxu0 0.0
    %1833 = vmatpush1.msra.mxu0 %v1808
    %1834 = vmatprep.subr.mxu0 0.0
    %1835 = vmatpush1.msra.mxu0 %v1809
    %1836 = vmatprep.subr.mxu0 0.0
    %1837 = vmatpush1.msra.mxu0 %v1810
    %1838 = vmatprep.subr.mxu0 0.0
    %1839 = vmatpush1.msra.mxu0 %v1811
    %1840 = vmatprep.subr.mxu0 0.0
    %1841 = vmatpush1.msra.mxu0 %v1812
    %1842 = vmatprep.subr.mxu0 0.0
    %1843 = vmatpush1.msra.mxu0 %v1813
    %1844 = vmatprep.subr.mxu0 0.0
    %1845 = vmatpush1.msra.mxu0 %v1814
    %1846 = vmatprep.subr.mxu0 0.0
    %1847 = vmatpush1.msra.mxu0 %v1815
    %1848 = vmatprep.subr.mxu0 0.0
    %1849 = vmatpush1.msra.mxu0 %v1816
    %1850 = vmatprep.subr.mxu0 0.0
    %1851 = vmatpush1.msra.mxu0 %v1817
    %1852 = vmatprep.subr.mxu0 0.0
    %1853 = vmatpush1.msra.mxu0 %v1818
    %1854 = vmatprep.subr.mxu0 0.0
    %1855 = vmatpush1.msra.mxu0 %v1819
    %1856 = vmatprep.subr.mxu0 0.0
    %1857 = vmatpush1.msra.mxu0 %v1820
    %1858 = vmatprep.subr.mxu0 0.0
    %1859 = vmatpush1.msra.mxu0 %v1821
    %1860 = vmatprep.subr.mxu0 0.0
    %1861 = vmatpush1.msra.mxu0 %v1822
    %1862 = vmatprep.subr.mxu0 0.0
    %1863 = vmatpush1.msra.mxu0 0.0
    %1864 = vmatprep.subr.mxu0 0.0
    %1865 = vmatpush1.msra.mxu0 0.0
    %1866 = vmatprep.subr.mxu0 0.0
    %1867 = vmatpush1.msra.mxu0 0.0
    %1868 = vmatprep.subr.mxu0 0.0
    %1869 = vmatpush1.msra.mxu0 0.0
    %1870 = vmatprep.subr.mxu0 0.0
    %1871 = vmatpush1.msra.mxu0 0.0
    %1872 = vmatprep.subr.mxu0 0.0
    %1873 = vmatpush1.msra.mxu0 0.0
    %1874 = vmatprep.subr.mxu0 0.0
    %1875 = vmatpush1.msra.mxu0 0.0
    %1876 = vmatprep.subr.mxu0 0.0
    %1877 = vmatpush1.msra.mxu0 0.0
    %1878 = vmatprep.subr.mxu0 0.0
    %1879 = vmatpush1.msra.mxu0 0.0
    %1880 = vmatprep.subr.mxu0 0.0
    %1881 = vmatpush1.msra.mxu0 0.0
    %1882 = vmatprep.subr.mxu0 0.0
    %1883 = vmatpush1.msra.mxu0 0.0
    %1884 = vmatprep.subr.mxu0 0.0
    %1885 = vmatpush1.msra.mxu0 0.0
    %1886 = vmatprep.subr.mxu0 0.0
    %1887 = vmatpush1.msra.mxu0 0.0
    %1888 = vmatprep.subr.mxu0 0.0
    %1889 = vmatpush1.msra.mxu0 0.0
    %1890 = vmatprep.subr.mxu0 0.0
    %1891 = vmatpush1.msra.mxu0 0.0
    %1892 = vmatprep.subr.mxu0 0.0
    %1893 = vmatpush1.msra.mxu0 0.0
    %1894 = vmatprep.mubr.f32.mxu0 0.0
    %1895 = vmatmul.mubr.f32.gmra.mrb[0].mxu0 %v1805
    %v1896 = vpop.f32.mrb[0].mxu0
    %v1897 = vadd.f32 %v1828, %v1896
    %v1898 = vpop.f32.mrb[0].mxu0
    %1899 = vmatprep.mubr.f32.mxu0 0.0
    %1900 = vmatmul.mubr.f32.gmra.mrb[0].mxu0 %v1806
    %v1901 = vpop.f32.mrb[0].mxu0
    %v1902 = vadd.f32 %v1828, %v1901
    %v1903 = vpop.f32.mrb[0].mxu0
    %1904 = vdwg.mxu0
    %v1905 = vadd.f32 %v1897, %v1651
    %v1906 = vadd.f32 %v1902, %v1652
    %1907 = vst.msk [vmem:[#allocation2] sm:$0xff] %vm49, %v1905
    %1908 = vst.msk [vmem:[#allocation2 + $0x8] sm:$0xff] %vm49, %v1906
    // Predicated region
    $region54: #{tpu_custom_call.1} parent=1 // pred_check
      _
    $region55: #{tpu_custom_call.1} parent=1 // pred_check_branch
      %1910 = sbr.rel (0) target = $region57
    $region56: #{tpu_custom_call.1} parent=1 // pred_region
      %s1912 = ssub.s32 256, 256
      %1913 = vsyncadd [#allocation3], %s1912
      %s1914 = sshll.u32 [#allocation2], 4
      %s1915 = int_to_ptr.vmem [resolvable:$true] %s1914
      %1920 = dma.vmem_to_hbm [thread:$0]  %s1915, 256, %s13, [#allocation3], 128, 128, 8
    $region57: #{tpu_custom_call.1} parent=1 // pred_fallthru
      _
    // Predicated region
    $region58: #{tpu_custom_call.1} parent=1 // pred_check
      _
    $region59: #{tpu_custom_call.1} parent=1 // pred_check_branch
      %1922 = sbr.rel (0) target = $region61
    $region60: #{tpu_custom_call.1} parent=1 // pred_region
      %1923 = dma.done [#allocation3], 256
    $region61: #{tpu_custom_call.1} parent=1 // pred_fallthru
      _
    %1924 = vsyncpa [#allocation3], 1

</llo_original>
